<compile_context>
chip_gen: v6e
topology: v6e:2x2x1
jax: 0.10.0
libtpu: 0.0.40
codegen_flags: <defaults>
</compile_context>

<pallas_src>
import functools

import jax
import jax.numpy as jnp
from jax.experimental import pallas as pl
from jax.experimental.pallas import tpu as pltpu


def _round_up(x, m):
    return ((x + m - 1) // m) * m


def gru_kernel(mask_ref, gi_ref, wh_ref, bh_ref, out_ref, hid_ref, h_scratch):
    """Grid = (batch_tiles, time_tiles); each call runs TT GRU steps for one
    batch tile. gi_ref already contains x@W_ih^T + b_ih (time-major)."""
    t_step = pl.program_id(1)
    TT = out_ref.shape[0]
    Hp = hid_ref.shape[-1]

    @pl.when(t_step == 0)
    def _():
        h_scratch[...] = jnp.zeros_like(h_scratch)

    h = h_scratch[...]                       # [BT, Hp] f32 carry
    wh = wh_ref[...]                         # [Hp, 3Hp] bf16
    bh = bh_ref[...]                         # [1, 3Hp] f32

    # Unrolled inner loop over TT time steps; h stays in vregs.
    for lt in range(TT):
        gi = gi_ref[lt]                      # [BT, 3Hp] f32 (b_ih already folded in)
        m = mask_ref[lt]                     # [BT, 1]  f32 {0,1}

        gh = jnp.dot(h.astype(jnp.bfloat16), wh,
                     preferred_element_type=jnp.float32) + bh

        # PyTorch GRU gate order: (r, z, n); slices are 128-lane aligned (Hp%128==0)
        r = jax.nn.sigmoid(gi[:, 0:Hp] + gh[:, 0:Hp])
        z = jax.nn.sigmoid(gi[:, Hp:2 * Hp] + gh[:, Hp:2 * Hp])
        n = jnp.tanh(gi[:, 2 * Hp:3 * Hp] + r * gh[:, 2 * Hp:3 * Hp])
        h_new = (1.0 - z) * n + z * h

        # freeze h past each sequence's length; padded positions store exact 0
        h = h + m * (h_new - h)
        out_ref[lt] = m * h                  # lane-dense [BT, Hp] store

    h_scratch[...] = h

    @pl.when(t_step == pl.num_programs(1) - 1)
    def _():
        hid_ref[...] = h                     # single write of the final hidden


def _pad_gates(a, H, Hp, axis=0):
    """Split a gate-stacked array (3H along `axis`) and zero-pad each gate to Hp."""
    parts = []
    for g in range(3):
        sl = [slice(None)] * a.ndim
        sl[axis] = slice(g * H, (g + 1) * H)
        pad = [(0, 0)] * a.ndim
        pad[axis] = (0, Hp - H)
        parts.append(jnp.pad(a[tuple(sl)], pad))
    return jnp.concatenate(parts, axis=axis)


def plain_encoder_forward(x_tokens, lengths, params, max_len=None, tt=16):
    """Forward pass equivalent to PlainEncoder.forward (eval mode).

    x_tokens: [B, T] int32 token ids
    lengths:  [B]    int32 valid lengths
    max_len:  static Python int == max(lengths) (pad_packed_sequence trims to it);
              if None, the full T is returned.
    returns (out [B, max_len, H], hid [1, B, H])
    """
    embed_tbl = params["embed"]                    # [V, E]
    # glue: embedding gather in plain JAX; dropout is identity in eval mode.
    # TODO(synk): training-mode dropout (p=0.2) not implemented (inference semantics).
    emb = embed_tbl[x_tokens].astype(jnp.float32)  # [B, T, E]
    B, T, E = emb.shape
    H = params["w_hh"].shape[1]

    # ---- hardware-aligned padded sizes ----
    Hp = _round_up(H, 128)                         # lane-aligned hidden
    Bp = _round_up(B, 8)                           # sublane-aligned batch
    BT = Bp if Bp <= 128 else 128                  # batch tile (parallel axis)
    Bp = _round_up(Bp, BT)
    TT = min(tt, _round_up(T, 8))                  # time steps per grid iter
    Tp = _round_up(T, TT)

    # ---- gate-blocked weight padding (zeros in padded lanes keep h_pad == 0) ----
    wih_p = _pad_gates(params["w_ih"].astype(jnp.float32), H, Hp, axis=0)   # [3Hp, E]
    bih_p = _pad_gates(params["b_ih"].astype(jnp.float32), H, Hp, axis=0)   # [3Hp]
    whh_p = _pad_gates(params["w_hh"].astype(jnp.float32), H, Hp, axis=0)   # [3Hp, H]
    whh_p = jnp.pad(whh_p, ((0, 0), (0, Hp - H)))                           # [3Hp, Hp]
    bhh_p = _pad_gates(params["b_hh"].astype(jnp.float32), H, Hp, axis=0)   # [3Hp]

    # ---- hoisted input projection: one big matmul, time-major output ----
    gi = jnp.einsum("bte,ge->tbg", emb, wih_p) + bih_p[None, None, :]       # [T, B, 3Hp]
    gi = jnp.pad(gi, ((0, Tp - T), (0, Bp - B), (0, 0)))                    # [Tp, Bp, 3Hp]

    # ---- validity mask (packed-sequence behavior) ----
    lens_p = jnp.zeros((Bp,), jnp.int32).at[:B].set(lengths.astype(jnp.int32))
    mask = (jnp.arange(Tp, dtype=jnp.int32)[:, None] < lens_p[None, :])
    mask = mask.astype(jnp.float32)[:, :, None]                             # [Tp, Bp, 1]

    wh_bf = jnp.transpose(whh_p).astype(jnp.bfloat16)                       # [Hp, 3Hp]
    bh = bhh_p.reshape(1, 3 * Hp).astype(jnp.float32)

    n_b = Bp // BT
    n_t = Tp // TT

    out_tm, hid_p = pl.pallas_call(
        gru_kernel,
        out_shape=(jax.ShapeDtypeStruct((Tp, Bp, Hp), jnp.float32),
                   jax.ShapeDtypeStruct((Bp, Hp), jnp.float32)),
        grid_spec=pltpu.PrefetchScalarGridSpec(
            num_scalar_prefetch=0,
            grid=(n_b, n_t),
            in_specs=[
                pl.BlockSpec((TT, BT, 1), lambda b, s: (s, b, 0)),        # mask
                pl.BlockSpec((TT, BT, 3 * Hp), lambda b, s: (s, b, 0)),   # gi (precomputed)
                pl.BlockSpec((Hp, 3 * Hp), lambda b, s: (0, 0)),          # W_hh^T (bf16)
                pl.BlockSpec((1, 3 * Hp), lambda b, s: (0, 0)),           # b_hh
            ],
            out_specs=[
                pl.BlockSpec((TT, BT, Hp), lambda b, s: (s, b, 0)),       # out (time-major)
                pl.BlockSpec((BT, Hp), lambda b, s: (b, 0)),              # final hidden
            ],
            scratch_shapes=[pltpu.VMEM((BT, Hp), jnp.float32)],           # carried h
        ),
        compiler_params=pltpu.CompilerParams(
            dimension_semantics=("parallel", "arbitrary")),               # batch || , time serial
    )(mask, gi, wh_bf, bh)

    if max_len is None:
        max_len = T
    out = jnp.transpose(out_tm, (1, 0, 2))[:B, :max_len, :H]              # [B, max_len, H]
    hid = hid_p[:B, :H][None]                                             # [1, B, H]
    return out, hid


def gru_reference(emb, lengths, params, max_len):
    """Plain-JAX reference mirroring the kernel numerics (bf16 hidden matmul)."""
    B, T, E = emb.shape
    H = params["w_hh"].shape[1]
    wi = params["w_ih"].astype(jnp.float32)
    wh = jnp.transpose(params["w_hh"]).astype(jnp.bfloat16)
    bi = params["b_ih"].astype(jnp.float32)
    bh = params["b_hh"].astype(jnp.float32)
    h = jnp.zeros((B, H), jnp.float32)
    outs = []
    for t in range(T):
        gi = emb[:, t] @ wi.T + bi
        gh = jnp.dot(h.astype(jnp.bfloat16), wh,
                     preferred_element_type=jnp.float32) + bh
        r = jax.nn.sigmoid(gi[:, :H] + gh[:, :H])
        z = jax.nn.sigmoid(gi[:, H:2 * H] + gh[:, H:2 * H])
        n = jnp.tanh(gi[:, 2 * H:] + r * gh[:, 2 * H:])
        h_new = (1.0 - z) * n + z * h
        m = (lengths > t)[:, None].astype(jnp.float32)
        h = h + m * (h_new - h)
        outs.append(m * h)
    out = jnp.stack(outs, axis=1)[:, :max_len]
    return out, h[None]


def init_params(key, vocab_size, embedding_size, hidden_size):
    """Deterministic parameter init matching nn.Embedding / nn.GRU shapes."""
    k_emb, k_wih, k_whh, k_bih, k_bhh = jax.random.split(key, 5)
    bound = 1.0 / jnp.sqrt(hidden_size)
    return {
        "embed": jax.random.normal(k_emb, (vocab_size, embedding_size), jnp.float32),
        "w_ih": jax.random.uniform(k_wih, (3 * hidden_size, embedding_size),
                                   jnp.float32, -bound, bound),
        "w_hh": jax.random.uniform(k_whh, (3 * hidden_size, hidden_size),
                                   jnp.float32, -bound, bound),
        "b_ih": jax.random.uniform(k_bih, (3 * hidden_size,),
                                   jnp.float32, -bound, bound),
        "b_hh": jax.random.uniform(k_bhh, (3 * hidden_size,),
                                   jnp.float32, -bound, bound),
    }


if __name__ == "__main__":
    vocab_size, embedding_size, hidden_size = 50, 16, 32
    batch, seq_len = 2, 8

    key = jax.random.PRNGKey(0)
    k_params, k_tok = jax.random.split(key)
    params = init_params(k_params, vocab_size, embedding_size, hidden_size)

    x = jax.random.randint(k_tok, (batch, seq_len), 0, vocab_size, jnp.int32)
    lengths_list = [seq_len, 5]                        # variable-length batch
    lengths = jnp.array(lengths_list, dtype=jnp.int32)
    max_len = max(lengths_list)                        # static (no device sync)

    out, hid = plain_encoder_forward(x, lengths, params, max_len=max_len)
    jax.block_until_ready((out, hid))

    assert out.shape == (batch, max_len, hidden_size)
    assert hid.shape == (1, batch, hidden_size)
    # padded positions of the shorter sequence must be exactly zero
    assert bool(jnp.all(out[1, 5:, :] == 0.0))
    # hid for the shorter sequence equals its last valid output step
    assert bool(jnp.allclose(hid[0, 1], out[1, 4], atol=1e-6))

    # numerical check vs. plain-JAX reference GRU with matching precision policy
    emb_ref = params["embed"][x].astype(jnp.float32)
    out_ref, hid_ref = gru_reference(emb_ref, lengths, params, max_len)
    assert bool(jnp.allclose(out, out_ref, atol=2e-3, rtol=2e-3))
    assert bool(jnp.allclose(hid, hid_ref, atol=2e-3, rtol=2e-3))

    print("KERNEL_OK")
</pallas_src>

<mosaic_0001>
module attributes {stable_mosaic.version = 11 : i64} {
  func.func @gru_kernel(%arg0: i32, %arg1: i32, %arg2: memref<8x8x1xf32, #tpu.memory_space<vmem>>, %arg3: memref<8x8x384xf32, #tpu.memory_space<vmem>>, %arg4: memref<128x384xbf16, #tpu.memory_space<vmem>>, %arg5: memref<1x384xf32, #tpu.memory_space<vmem>>, %arg6: memref<8x8x128xf32, #tpu.memory_space<vmem>>, %arg7: memref<8x128xf32, #tpu.memory_space<vmem>>, %arg8: memref<8x128xf32, #tpu.memory_space<vmem>>) attributes {dimension_semantics = [#tpu.dimension_semantics<parallel>, #tpu.dimension_semantics<arbitrary>], iteration_bounds = array<i64: 1, 1>, scalar_prefetch = 0 : i64, scratch_operands = 1 : i64, tpu.core_type = #tpu.core_type<tc>, window_params = [{transform_indices = @transform_0, window_bounds = array<i64: 8, 8, 1>}, {transform_indices = @transform_1, window_bounds = array<i64: 8, 8, 384>}, {pipeline_mode = #tpu.pipeline_mode<synchronous>, transform_indices = @transform_2, window_bounds = array<i64: 128, 384>}, {pipeline_mode = #tpu.pipeline_mode<synchronous>, transform_indices = @transform_3, window_bounds = array<i64: 1, 384>}, {transform_indices = @transform_4, window_bounds = array<i64: 8, 8, 128>}, {transform_indices = @transform_5, window_bounds = array<i64: 8, 128>}]} {
    %c0_i32 = arith.constant 0 : i32
    %0 = arith.cmpi eq, %arg1, %c0_i32 : i32
    %1 = arith.extui %0 : i1 to i32
    %c0_i32_0 = arith.constant 0 : i32
    %2 = arith.cmpi ne, %1, %c0_i32_0 : i32
    scf.if %2 {
      %cst_106 = arith.constant 0.000000e+00 : f32
      %354 = vector.broadcast %cst_106 : f32 to vector<8x128xf32>
      %c0_107 = arith.constant 0 : index
      %c0_108 = arith.constant 0 : index
      %355 = vector.load %arg8[%c0_107, %c0_108] : memref<8x128xf32, #tpu.memory_space<vmem>>, vector<8x128xf32>
      tpu.vector_store %arg8[%c0_107, %c0_108], %354 {strides = array<i32>} : memref<8x128xf32, #tpu.memory_space<vmem>>, vector<8x128xf32>,
    } else {
    }
    %c0 = arith.constant 0 : index
    %c0_1 = arith.constant 0 : index
    %3 = vector.load %arg8[%c0, %c0_1] : memref<8x128xf32, #tpu.memory_space<vmem>>, vector<8x128xf32>
    %c0_2 = arith.constant 0 : index
    %c0_3 = arith.constant 0 : index
    %4 = vector.load %arg4[%c0_2, %c0_3] : memref<128x384xbf16, #tpu.memory_space<vmem>>, vector<128x384xbf16>
    %c0_4 = arith.constant 0 : index
    %c0_5 = arith.constant 0 : index
    %5 = vector.load %arg5[%c0_4, %c0_5] : memref<1x384xf32, #tpu.memory_space<vmem>>, vector<1x384xf32>
    %c0_6 = arith.constant 0 : index
    %c0_7 = arith.constant 0 : index
    %c0_8 = arith.constant 0 : index
    %6 = vector.load %arg3[%c0_6, %c0_7, %c0_8] : memref<8x8x384xf32, #tpu.memory_space<vmem>>, vector<1x8x384xf32>
    %7 = vector.shape_cast %6 : vector<1x8x384xf32> to vector<8x384xf32>
    %c0_9 = arith.constant 0 : index
    %c0_10 = arith.constant 0 : index
    %c0_11 = arith.constant 0 : index
    %8 = vector.load %arg2[%c0_9, %c0_10, %c0_11] : memref<8x8x1xf32, #tpu.memory_space<vmem>>, vector<1x8x1xf32>
    %9 = vector.shape_cast %8 : vector<1x8x1xf32> to vector<8x1xf32>
    %10 = arith.truncf %3 : vector<8x128xf32> to vector<8x128xbf16>
    %cst = arith.constant dense<0.000000e+00> : vector<8x384xf32>
    %11 = tpu.matmul %10, %4, %cst {dimension_numbers = #tpu.dot_dimension_numbers<[1], [0], [0], [1], [0, 0, 1, 1], [], []>} : vector<8x128xbf16>, vector<128x384xbf16>, vector<8x384xf32> -> vector<8x384xf32>
    %12 = vector.broadcast %5 : vector<1x384xf32> to vector<8x384xf32>
    %13 = arith.addf %11, %12 : vector<8x384xf32>
    %14 = vector.extract_strided_slice %7 {offsets = [0, 0], sizes = [8, 128], strides = [1, 1]} : vector<8x384xf32> to vector<8x128xf32>
    %15 = vector.extract_strided_slice %13 {offsets = [0, 0], sizes = [8, 128], strides = [1, 1]} : vector<8x384xf32> to vector<8x128xf32>
    %16 = arith.addf %14, %15 : vector<8x128xf32>
    %17 = arith.negf %16 : vector<8x128xf32>
    %18 = math.exp %17 : vector<8x128xf32>
    %cst_12 = arith.constant 1.000000e+00 : f32
    %19 = vector.broadcast %cst_12 : f32 to vector<8x128xf32>
    %20 = arith.addf %19, %18 : vector<8x128xf32>
    %21 = arith.divf %19, %20 : vector<8x128xf32>
    %22 = vector.extract_strided_slice %7 {offsets = [0, 128], sizes = [8, 128], strides = [1, 1]} : vector<8x384xf32> to vector<8x128xf32>
    %23 = vector.extract_strided_slice %13 {offsets = [0, 128], sizes = [8, 128], strides = [1, 1]} : vector<8x384xf32> to vector<8x128xf32>
    %24 = arith.addf %22, %23 : vector<8x128xf32>
    %25 = arith.negf %24 : vector<8x128xf32>
    %26 = math.exp %25 : vector<8x128xf32>
    %cst_13 = arith.constant 1.000000e+00 : f32
    %27 = vector.broadcast %cst_13 : f32 to vector<8x128xf32>
    %28 = arith.addf %27, %26 : vector<8x128xf32>
    %29 = arith.divf %27, %28 : vector<8x128xf32>
    %30 = vector.extract_strided_slice %7 {offsets = [0, 256], sizes = [8, 128], strides = [1, 1]} : vector<8x384xf32> to vector<8x128xf32>
    %31 = vector.extract_strided_slice %13 {offsets = [0, 256], sizes = [8, 128], strides = [1, 1]} : vector<8x384xf32> to vector<8x128xf32>
    %32 = arith.mulf %21, %31 : vector<8x128xf32>
    %33 = arith.addf %30, %32 : vector<8x128xf32>
    %34 = math.tanh %33 : vector<8x128xf32>
    %cst_14 = arith.constant 1.000000e+00 : f32
    %35 = vector.broadcast %cst_14 : f32 to vector<8x128xf32>
    %36 = arith.subf %35, %29 : vector<8x128xf32>
    %37 = arith.mulf %36, %34 : vector<8x128xf32>
    %38 = arith.mulf %29, %3 : vector<8x128xf32>
    %39 = arith.addf %37, %38 : vector<8x128xf32>
    %40 = arith.subf %39, %3 : vector<8x128xf32>
    %41 = vector.broadcast %9 : vector<8x1xf32> to vector<8x128xf32>
    %42 = arith.mulf %41, %40 : vector<8x128xf32>
    %43 = arith.addf %3, %42 : vector<8x128xf32>
    %44 = vector.broadcast %9 : vector<8x1xf32> to vector<8x128xf32>
    %45 = arith.mulf %44, %43 : vector<8x128xf32>
    %c0_15 = arith.constant 0 : index
    %c0_16 = arith.constant 0 : index
    %c0_17 = arith.constant 0 : index
    %46 = vector.load %arg6[%c0_15, %c0_16, %c0_17] : memref<8x8x128xf32, #tpu.memory_space<vmem>>, vector<1x8x128xf32>
    %47 = vector.shape_cast %46 : vector<1x8x128xf32> to vector<8x128xf32>
    %48 = vector.shape_cast %45 : vector<8x128xf32> to vector<1x8x128xf32>
    tpu.vector_store %arg6[%c0_15, %c0_16, %c0_17], %48 {strides = array<i32>} : memref<8x8x128xf32, #tpu.memory_space<vmem>>, vector<1x8x128xf32>,
    %c1 = arith.constant 1 : index
    %c0_18 = arith.constant 0 : index
    %c0_19 = arith.constant 0 : index
    %49 = vector.load %arg3[%c1, %c0_18, %c0_19] : memref<8x8x384xf32, #tpu.memory_space<vmem>>, vector<1x8x384xf32>
    %50 = vector.shape_cast %49 : vector<1x8x384xf32> to vector<8x384xf32>
    %c1_20 = arith.constant 1 : index
    %c0_21 = arith.constant 0 : index
    %c0_22 = arith.constant 0 : index
    %51 = vector.load %arg2[%c1_20, %c0_21, %c0_22] : memref<8x8x1xf32, #tpu.memory_space<vmem>>, vector<1x8x1xf32>
    %52 = vector.shape_cast %51 : vector<1x8x1xf32> to vector<8x1xf32>
    %53 = arith.truncf %43 : vector<8x128xf32> to vector<8x128xbf16>
    %cst_23 = arith.constant dense<0.000000e+00> : vector<8x384xf32>
    %54 = tpu.matmul %53, %4, %cst_23 {dimension_numbers = #tpu.dot_dimension_numbers<[1], [0], [0], [1], [0, 0, 1, 1], [], []>} : vector<8x128xbf16>, vector<128x384xbf16>, vector<8x384xf32> -> vector<8x384xf32>
    %55 = vector.broadcast %5 : vector<1x384xf32> to vector<8x384xf32>
    %56 = arith.addf %54, %55 : vector<8x384xf32>
    %57 = vector.extract_strided_slice %50 {offsets = [0, 0], sizes = [8, 128], strides = [1, 1]} : vector<8x384xf32> to vector<8x128xf32>
    %58 = vector.extract_strided_slice %56 {offsets = [0, 0], sizes = [8, 128], strides = [1, 1]} : vector<8x384xf32> to vector<8x128xf32>
    %59 = arith.addf %57, %58 : vector<8x128xf32>
    %60 = arith.negf %59 : vector<8x128xf32>
    %61 = math.exp %60 : vector<8x128xf32>
    %cst_24 = arith.constant 1.000000e+00 : f32
    %62 = vector.broadcast %cst_24 : f32 to vector<8x128xf32>
    %63 = arith.addf %62, %61 : vector<8x128xf32>
    %64 = arith.divf %62, %63 : vector<8x128xf32>
    %65 = vector.extract_strided_slice %50 {offsets = [0, 128], sizes = [8, 128], strides = [1, 1]} : vector<8x384xf32> to vector<8x128xf32>
    %66 = vector.extract_strided_slice %56 {offsets = [0, 128], sizes = [8, 128], strides = [1, 1]} : vector<8x384xf32> to vector<8x128xf32>
    %67 = arith.addf %65, %66 : vector<8x128xf32>
    %68 = arith.negf %67 : vector<8x128xf32>
    %69 = math.exp %68 : vector<8x128xf32>
    %cst_25 = arith.constant 1.000000e+00 : f32
    %70 = vector.broadcast %cst_25 : f32 to vector<8x128xf32>
    %71 = arith.addf %70, %69 : vector<8x128xf32>
    %72 = arith.divf %70, %71 : vector<8x128xf32>
    %73 = vector.extract_strided_slice %50 {offsets = [0, 256], sizes = [8, 128], strides = [1, 1]} : vector<8x384xf32> to vector<8x128xf32>
    %74 = vector.extract_strided_slice %56 {offsets = [0, 256], sizes = [8, 128], strides = [1, 1]} : vector<8x384xf32> to vector<8x128xf32>
    %75 = arith.mulf %64, %74 : vector<8x128xf32>
    %76 = arith.addf %73, %75 : vector<8x128xf32>
    %77 = math.tanh %76 : vector<8x128xf32>
    %cst_26 = arith.constant 1.000000e+00 : f32
    %78 = vector.broadcast %cst_26 : f32 to vector<8x128xf32>
    %79 = arith.subf %78, %72 : vector<8x128xf32>
    %80 = arith.mulf %79, %77 : vector<8x128xf32>
    %81 = arith.mulf %72, %43 : vector<8x128xf32>
    %82 = arith.addf %80, %81 : vector<8x128xf32>
    %83 = arith.subf %82, %43 : vector<8x128xf32>
    %84 = vector.broadcast %52 : vector<8x1xf32> to vector<8x128xf32>
    %85 = arith.mulf %84, %83 : vector<8x128xf32>
    %86 = arith.addf %43, %85 : vector<8x128xf32>
    %87 = vector.broadcast %52 : vector<8x1xf32> to vector<8x128xf32>
    %88 = arith.mulf %87, %86 : vector<8x128xf32>
    %c1_27 = arith.constant 1 : index
    %c0_28 = arith.constant 0 : index
    %c0_29 = arith.constant 0 : index
    %89 = vector.load %arg6[%c1_27, %c0_28, %c0_29] : memref<8x8x128xf32, #tpu.memory_space<vmem>>, vector<1x8x128xf32>
    %90 = vector.shape_cast %89 : vector<1x8x128xf32> to vector<8x128xf32>
    %91 = vector.shape_cast %88 : vector<8x128xf32> to vector<1x8x128xf32>
    tpu.vector_store %arg6[%c1_27, %c0_28, %c0_29], %91 {strides = array<i32>} : memref<8x8x128xf32, #tpu.memory_space<vmem>>, vector<1x8x128xf32>,
    %c2 = arith.constant 2 : index
    %c0_30 = arith.constant 0 : index
    %c0_31 = arith.constant 0 : index
    %92 = vector.load %arg3[%c2, %c0_30, %c0_31] : memref<8x8x384xf32, #tpu.memory_space<vmem>>, vector<1x8x384xf32>
    %93 = vector.shape_cast %92 : vector<1x8x384xf32> to vector<8x384xf32>
    %c2_32 = arith.constant 2 : index
    %c0_33 = arith.constant 0 : index
    %c0_34 = arith.constant 0 : index
    %94 = vector.load %arg2[%c2_32, %c0_33, %c0_34] : memref<8x8x1xf32, #tpu.memory_space<vmem>>, vector<1x8x1xf32>
    %95 = vector.shape_cast %94 : vector<1x8x1xf32> to vector<8x1xf32>
    %96 = arith.truncf %86 : vector<8x128xf32> to vector<8x128xbf16>
    %cst_35 = arith.constant dense<0.000000e+00> : vector<8x384xf32>
    %97 = tpu.matmul %96, %4, %cst_35 {dimension_numbers = #tpu.dot_dimension_numbers<[1], [0], [0], [1], [0, 0, 1, 1], [], []>} : vector<8x128xbf16>, vector<128x384xbf16>, vector<8x384xf32> -> vector<8x384xf32>
    %98 = vector.broadcast %5 : vector<1x384xf32> to vector<8x384xf32>
    %99 = arith.addf %97, %98 : vector<8x384xf32>
    %100 = vector.extract_strided_slice %93 {offsets = [0, 0], sizes = [8, 128], strides = [1, 1]} : vector<8x384xf32> to vector<8x128xf32>
    %101 = vector.extract_strided_slice %99 {offsets = [0, 0], sizes = [8, 128], strides = [1, 1]} : vector<8x384xf32> to vector<8x128xf32>
    %102 = arith.addf %100, %101 : vector<8x128xf32>
    %103 = arith.negf %102 : vector<8x128xf32>
    %104 = math.exp %103 : vector<8x128xf32>
    %cst_36 = arith.constant 1.000000e+00 : f32
    %105 = vector.broadcast %cst_36 : f32 to vector<8x128xf32>
    %106 = arith.addf %105, %104 : vector<8x128xf32>
    %107 = arith.divf %105, %106 : vector<8x128xf32>
    %108 = vector.extract_strided_slice %93 {offsets = [0, 128], sizes = [8, 128], strides = [1, 1]} : vector<8x384xf32> to vector<8x128xf32>
    %109 = vector.extract_strided_slice %99 {offsets = [0, 128], sizes = [8, 128], strides = [1, 1]} : vector<8x384xf32> to vector<8x128xf32>
    %110 = arith.addf %108, %109 : vector<8x128xf32>
    %111 = arith.negf %110 : vector<8x128xf32>
    %112 = math.exp %111 : vector<8x128xf32>
    %cst_37 = arith.constant 1.000000e+00 : f32
    %113 = vector.broadcast %cst_37 : f32 to vector<8x128xf32>
    %114 = arith.addf %113, %112 : vector<8x128xf32>
    %115 = arith.divf %113, %114 : vector<8x128xf32>
    %116 = vector.extract_strided_slice %93 {offsets = [0, 256], sizes = [8, 128], strides = [1, 1]} : vector<8x384xf32> to vector<8x128xf32>
    %117 = vector.extract_strided_slice %99 {offsets = [0, 256], sizes = [8, 128], strides = [1, 1]} : vector<8x384xf32> to vector<8x128xf32>
    %118 = arith.mulf %107, %117 : vector<8x128xf32>
    %119 = arith.addf %116, %118 : vector<8x128xf32>
    %120 = math.tanh %119 : vector<8x128xf32>
    %cst_38 = arith.constant 1.000000e+00 : f32
    %121 = vector.broadcast %cst_38 : f32 to vector<8x128xf32>
    %122 = arith.subf %121, %115 : vector<8x128xf32>
    %123 = arith.mulf %122, %120 : vector<8x128xf32>
    %124 = arith.mulf %115, %86 : vector<8x128xf32>
    %125 = arith.addf %123, %124 : vector<8x128xf32>
    %126 = arith.subf %125, %86 : vector<8x128xf32>
    %127 = vector.broadcast %95 : vector<8x1xf32> to vector<8x128xf32>
    %128 = arith.mulf %127, %126 : vector<8x128xf32>
    %129 = arith.addf %86, %128 : vector<8x128xf32>
    %130 = vector.broadcast %95 : vector<8x1xf32> to vector<8x128xf32>
    %131 = arith.mulf %130, %129 : vector<8x128xf32>
    %c2_39 = arith.constant 2 : index
    %c0_40 = arith.constant 0 : index
    %c0_41 = arith.constant 0 : index
    %132 = vector.load %arg6[%c2_39, %c0_40, %c0_41] : memref<8x8x128xf32, #tpu.memory_space<vmem>>, vector<1x8x128xf32>
    %133 = vector.shape_cast %132 : vector<1x8x128xf32> to vector<8x128xf32>
    %134 = vector.shape_cast %131 : vector<8x128xf32> to vector<1x8x128xf32>
    tpu.vector_store %arg6[%c2_39, %c0_40, %c0_41], %134 {strides = array<i32>} : memref<8x8x128xf32, #tpu.memory_space<vmem>>, vector<1x8x128xf32>,
    %c3 = arith.constant 3 : index
    %c0_42 = arith.constant 0 : index
    %c0_43 = arith.constant 0 : index
    %135 = vector.load %arg3[%c3, %c0_42, %c0_43] : memref<8x8x384xf32, #tpu.memory_space<vmem>>, vector<1x8x384xf32>
    %136 = vector.shape_cast %135 : vector<1x8x384xf32> to vector<8x384xf32>
    %c3_44 = arith.constant 3 : index
    %c0_45 = arith.constant 0 : index
    %c0_46 = arith.constant 0 : index
    %137 = vector.load %arg2[%c3_44, %c0_45, %c0_46] : memref<8x8x1xf32, #tpu.memory_space<vmem>>, vector<1x8x1xf32>
    %138 = vector.shape_cast %137 : vector<1x8x1xf32> to vector<8x1xf32>
    %139 = arith.truncf %129 : vector<8x128xf32> to vector<8x128xbf16>
    %cst_47 = arith.constant dense<0.000000e+00> : vector<8x384xf32>
    %140 = tpu.matmul %139, %4, %cst_47 {dimension_numbers = #tpu.dot_dimension_numbers<[1], [0], [0], [1], [0, 0, 1, 1], [], []>} : vector<8x128xbf16>, vector<128x384xbf16>, vector<8x384xf32> -> vector<8x384xf32>
    %141 = vector.broadcast %5 : vector<1x384xf32> to vector<8x384xf32>
    %142 = arith.addf %140, %141 : vector<8x384xf32>
    %143 = vector.extract_strided_slice %136 {offsets = [0, 0], sizes = [8, 128], strides = [1, 1]} : vector<8x384xf32> to vector<8x128xf32>
    %144 = vector.extract_strided_slice %142 {offsets = [0, 0], sizes = [8, 128], strides = [1, 1]} : vector<8x384xf32> to vector<8x128xf32>
    %145 = arith.addf %143, %144 : vector<8x128xf32>
    %146 = arith.negf %145 : vector<8x128xf32>
    %147 = math.exp %146 : vector<8x128xf32>
    %cst_48 = arith.constant 1.000000e+00 : f32
    %148 = vector.broadcast %cst_48 : f32 to vector<8x128xf32>
    %149 = arith.addf %148, %147 : vector<8x128xf32>
    %150 = arith.divf %148, %149 : vector<8x128xf32>
    %151 = vector.extract_strided_slice %136 {offsets = [0, 128], sizes = [8, 128], strides = [1, 1]} : vector<8x384xf32> to vector<8x128xf32>
    %152 = vector.extract_strided_slice %142 {offsets = [0, 128], sizes = [8, 128], strides = [1, 1]} : vector<8x384xf32> to vector<8x128xf32>
    %153 = arith.addf %151, %152 : vector<8x128xf32>
    %154 = arith.negf %153 : vector<8x128xf32>
    %155 = math.exp %154 : vector<8x128xf32>
    %cst_49 = arith.constant 1.000000e+00 : f32
    %156 = vector.broadcast %cst_49 : f32 to vector<8x128xf32>
    %157 = arith.addf %156, %155 : vector<8x128xf32>
    %158 = arith.divf %156, %157 : vector<8x128xf32>
    %159 = vector.extract_strided_slice %136 {offsets = [0, 256], sizes = [8, 128], strides = [1, 1]} : vector<8x384xf32> to vector<8x128xf32>
    %160 = vector.extract_strided_slice %142 {offsets = [0, 256], sizes = [8, 128], strides = [1, 1]} : vector<8x384xf32> to vector<8x128xf32>
    %161 = arith.mulf %150, %160 : vector<8x128xf32>
    %162 = arith.addf %159, %161 : vector<8x128xf32>
    %163 = math.tanh %162 : vector<8x128xf32>
    %cst_50 = arith.constant 1.000000e+00 : f32
    %164 = vector.broadcast %cst_50 : f32 to vector<8x128xf32>
    %165 = arith.subf %164, %158 : vector<8x128xf32>
    %166 = arith.mulf %165, %163 : vector<8x128xf32>
    %167 = arith.mulf %158, %129 : vector<8x128xf32>
    %168 = arith.addf %166, %167 : vector<8x128xf32>
    %169 = arith.subf %168, %129 : vector<8x128xf32>
    %170 = vector.broadcast %138 : vector<8x1xf32> to vector<8x128xf32>
    %171 = arith.mulf %170, %169 : vector<8x128xf32>
    %172 = arith.addf %129, %171 : vector<8x128xf32>
    %173 = vector.broadcast %138 : vector<8x1xf32> to vector<8x128xf32>
    %174 = arith.mulf %173, %172 : vector<8x128xf32>
    %c3_51 = arith.constant 3 : index
    %c0_52 = arith.constant 0 : index
    %c0_53 = arith.constant 0 : index
    %175 = vector.load %arg6[%c3_51, %c0_52, %c0_53] : memref<8x8x128xf32, #tpu.memory_space<vmem>>, vector<1x8x128xf32>
    %176 = vector.shape_cast %175 : vector<1x8x128xf32> to vector<8x128xf32>
    %177 = vector.shape_cast %174 : vector<8x128xf32> to vector<1x8x128xf32>
    tpu.vector_store %arg6[%c3_51, %c0_52, %c0_53], %177 {strides = array<i32>} : memref<8x8x128xf32, #tpu.memory_space<vmem>>, vector<1x8x128xf32>,
    %c4 = arith.constant 4 : index
    %c0_54 = arith.constant 0 : index
    %c0_55 = arith.constant 0 : index
    %178 = vector.load %arg3[%c4, %c0_54, %c0_55] : memref<8x8x384xf32, #tpu.memory_space<vmem>>, vector<1x8x384xf32>
    %179 = vector.shape_cast %178 : vector<1x8x384xf32> to vector<8x384xf32>
    %c4_56 = arith.constant 4 : index
    %c0_57 = arith.constant 0 : index
    %c0_58 = arith.constant 0 : index
    %180 = vector.load %arg2[%c4_56, %c0_57, %c0_58] : memref<8x8x1xf32, #tpu.memory_space<vmem>>, vector<1x8x1xf32>
    %181 = vector.shape_cast %180 : vector<1x8x1xf32> to vector<8x1xf32>
    %182 = arith.truncf %172 : vector<8x128xf32> to vector<8x128xbf16>
    %cst_59 = arith.constant dense<0.000000e+00> : vector<8x384xf32>
    %183 = tpu.matmul %182, %4, %cst_59 {dimension_numbers = #tpu.dot_dimension_numbers<[1], [0], [0], [1], [0, 0, 1, 1], [], []>} : vector<8x128xbf16>, vector<128x384xbf16>, vector<8x384xf32> -> vector<8x384xf32>
    %184 = vector.broadcast %5 : vector<1x384xf32> to vector<8x384xf32>
    %185 = arith.addf %183, %184 : vector<8x384xf32>
    %186 = vector.extract_strided_slice %179 {offsets = [0, 0], sizes = [8, 128], strides = [1, 1]} : vector<8x384xf32> to vector<8x128xf32>
    %187 = vector.extract_strided_slice %185 {offsets = [0, 0], sizes = [8, 128], strides = [1, 1]} : vector<8x384xf32> to vector<8x128xf32>
    %188 = arith.addf %186, %187 : vector<8x128xf32>
    %189 = arith.negf %188 : vector<8x128xf32>
    %190 = math.exp %189 : vector<8x128xf32>
    %cst_60 = arith.constant 1.000000e+00 : f32
    %191 = vector.broadcast %cst_60 : f32 to vector<8x128xf32>
    %192 = arith.addf %191, %190 : vector<8x128xf32>
    %193 = arith.divf %191, %192 : vector<8x128xf32>
    %194 = vector.extract_strided_slice %179 {offsets = [0, 128], sizes = [8, 128], strides = [1, 1]} : vector<8x384xf32> to vector<8x128xf32>
    %195 = vector.extract_strided_slice %185 {offsets = [0, 128], sizes = [8, 128], strides = [1, 1]} : vector<8x384xf32> to vector<8x128xf32>
    %196 = arith.addf %194, %195 : vector<8x128xf32>
    %197 = arith.negf %196 : vector<8x128xf32>
    %198 = math.exp %197 : vector<8x128xf32>
    %cst_61 = arith.constant 1.000000e+00 : f32
    %199 = vector.broadcast %cst_61 : f32 to vector<8x128xf32>
    %200 = arith.addf %199, %198 : vector<8x128xf32>
    %201 = arith.divf %199, %200 : vector<8x128xf32>
    %202 = vector.extract_strided_slice %179 {offsets = [0, 256], sizes = [8, 128], strides = [1, 1]} : vector<8x384xf32> to vector<8x128xf32>
    %203 = vector.extract_strided_slice %185 {offsets = [0, 256], sizes = [8, 128], strides = [1, 1]} : vector<8x384xf32> to vector<8x128xf32>
    %204 = arith.mulf %193, %203 : vector<8x128xf32>
    %205 = arith.addf %202, %204 : vector<8x128xf32>
    %206 = math.tanh %205 : vector<8x128xf32>
    %cst_62 = arith.constant 1.000000e+00 : f32
    %207 = vector.broadcast %cst_62 : f32 to vector<8x128xf32>
    %208 = arith.subf %207, %201 : vector<8x128xf32>
    %209 = arith.mulf %208, %206 : vector<8x128xf32>
    %210 = arith.mulf %201, %172 : vector<8x128xf32>
    %211 = arith.addf %209, %210 : vector<8x128xf32>
    %212 = arith.subf %211, %172 : vector<8x128xf32>
    %213 = vector.broadcast %181 : vector<8x1xf32> to vector<8x128xf32>
    %214 = arith.mulf %213, %212 : vector<8x128xf32>
    %215 = arith.addf %172, %214 : vector<8x128xf32>
    %216 = vector.broadcast %181 : vector<8x1xf32> to vector<8x128xf32>
    %217 = arith.mulf %216, %215 : vector<8x128xf32>
    %c4_63 = arith.constant 4 : index
    %c0_64 = arith.constant 0 : index
    %c0_65 = arith.constant 0 : index
    %218 = vector.load %arg6[%c4_63, %c0_64, %c0_65] : memref<8x8x128xf32, #tpu.memory_space<vmem>>, vector<1x8x128xf32>
    %219 = vector.shape_cast %218 : vector<1x8x128xf32> to vector<8x128xf32>
    %220 = vector.shape_cast %217 : vector<8x128xf32> to vector<1x8x128xf32>
    tpu.vector_store %arg6[%c4_63, %c0_64, %c0_65], %220 {strides = array<i32>} : memref<8x8x128xf32, #tpu.memory_space<vmem>>, vector<1x8x128xf32>,
    %c5 = arith.constant 5 : index
    %c0_66 = arith.constant 0 : index
    %c0_67 = arith.constant 0 : index
    %221 = vector.load %arg3[%c5, %c0_66, %c0_67] : memref<8x8x384xf32, #tpu.memory_space<vmem>>, vector<1x8x384xf32>
    %222 = vector.shape_cast %221 : vector<1x8x384xf32> to vector<8x384xf32>
    %c5_68 = arith.constant 5 : index
    %c0_69 = arith.constant 0 : index
    %c0_70 = arith.constant 0 : index
    %223 = vector.load %arg2[%c5_68, %c0_69, %c0_70] : memref<8x8x1xf32, #tpu.memory_space<vmem>>, vector<1x8x1xf32>
    %224 = vector.shape_cast %223 : vector<1x8x1xf32> to vector<8x1xf32>
    %225 = arith.truncf %215 : vector<8x128xf32> to vector<8x128xbf16>
    %cst_71 = arith.constant dense<0.000000e+00> : vector<8x384xf32>
    %226 = tpu.matmul %225, %4, %cst_71 {dimension_numbers = #tpu.dot_dimension_numbers<[1], [0], [0], [1], [0, 0, 1, 1], [], []>} : vector<8x128xbf16>, vector<128x384xbf16>, vector<8x384xf32> -> vector<8x384xf32>
    %227 = vector.broadcast %5 : vector<1x384xf32> to vector<8x384xf32>
    %228 = arith.addf %226, %227 : vector<8x384xf32>
    %229 = vector.extract_strided_slice %222 {offsets = [0, 0], sizes = [8, 128], strides = [1, 1]} : vector<8x384xf32> to vector<8x128xf32>
    %230 = vector.extract_strided_slice %228 {offsets = [0, 0], sizes = [8, 128], strides = [1, 1]} : vector<8x384xf32> to vector<8x128xf32>
    %231 = arith.addf %229, %230 : vector<8x128xf32>
    %232 = arith.negf %231 : vector<8x128xf32>
    %233 = math.exp %232 : vector<8x128xf32>
    %cst_72 = arith.constant 1.000000e+00 : f32
    %234 = vector.broadcast %cst_72 : f32 to vector<8x128xf32>
    %235 = arith.addf %234, %233 : vector<8x128xf32>
    %236 = arith.divf %234, %235 : vector<8x128xf32>
    %237 = vector.extract_strided_slice %222 {offsets = [0, 128], sizes = [8, 128], strides = [1, 1]} : vector<8x384xf32> to vector<8x128xf32>
    %238 = vector.extract_strided_slice %228 {offsets = [0, 128], sizes = [8, 128], strides = [1, 1]} : vector<8x384xf32> to vector<8x128xf32>
    %239 = arith.addf %237, %238 : vector<8x128xf32>
    %240 = arith.negf %239 : vector<8x128xf32>
    %241 = math.exp %240 : vector<8x128xf32>
    %cst_73 = arith.constant 1.000000e+00 : f32
    %242 = vector.broadcast %cst_73 : f32 to vector<8x128xf32>
    %243 = arith.addf %242, %241 : vector<8x128xf32>
    %244 = arith.divf %242, %243 : vector<8x128xf32>
    %245 = vector.extract_strided_slice %222 {offsets = [0, 256], sizes = [8, 128], strides = [1, 1]} : vector<8x384xf32> to vector<8x128xf32>
    %246 = vector.extract_strided_slice %228 {offsets = [0, 256], sizes = [8, 128], strides = [1, 1]} : vector<8x384xf32> to vector<8x128xf32>
    %247 = arith.mulf %236, %246 : vector<8x128xf32>
    %248 = arith.addf %245, %247 : vector<8x128xf32>
    %249 = math.tanh %248 : vector<8x128xf32>
    %cst_74 = arith.constant 1.000000e+00 : f32
    %250 = vector.broadcast %cst_74 : f32 to vector<8x128xf32>
    %251 = arith.subf %250, %244 : vector<8x128xf32>
    %252 = arith.mulf %251, %249 : vector<8x128xf32>
    %253 = arith.mulf %244, %215 : vector<8x128xf32>
    %254 = arith.addf %252, %253 : vector<8x128xf32>
    %255 = arith.subf %254, %215 : vector<8x128xf32>
    %256 = vector.broadcast %224 : vector<8x1xf32> to vector<8x128xf32>
    %257 = arith.mulf %256, %255 : vector<8x128xf32>
    %258 = arith.addf %215, %257 : vector<8x128xf32>
    %259 = vector.broadcast %224 : vector<8x1xf32> to vector<8x128xf32>
    %260 = arith.mulf %259, %258 : vector<8x128xf32>
    %c5_75 = arith.constant 5 : index
    %c0_76 = arith.constant 0 : index
    %c0_77 = arith.constant 0 : index
    %261 = vector.load %arg6[%c5_75, %c0_76, %c0_77] : memref<8x8x128xf32, #tpu.memory_space<vmem>>, vector<1x8x128xf32>
    %262 = vector.shape_cast %261 : vector<1x8x128xf32> to vector<8x128xf32>
    %263 = vector.shape_cast %260 : vector<8x128xf32> to vector<1x8x128xf32>
    tpu.vector_store %arg6[%c5_75, %c0_76, %c0_77], %263 {strides = array<i32>} : memref<8x8x128xf32, #tpu.memory_space<vmem>>, vector<1x8x128xf32>,
    %c6 = arith.constant 6 : index
    %c0_78 = arith.constant 0 : index
    %c0_79 = arith.constant 0 : index
    %264 = vector.load %arg3[%c6, %c0_78, %c0_79] : memref<8x8x384xf32, #tpu.memory_space<vmem>>, vector<1x8x384xf32>
    %265 = vector.shape_cast %264 : vector<1x8x384xf32> to vector<8x384xf32>
    %c6_80 = arith.constant 6 : index
    %c0_81 = arith.constant 0 : index
    %c0_82 = arith.constant 0 : index
    %266 = vector.load %arg2[%c6_80, %c0_81, %c0_82] : memref<8x8x1xf32, #tpu.memory_space<vmem>>, vector<1x8x1xf32>
    %267 = vector.shape_cast %266 : vector<1x8x1xf32> to vector<8x1xf32>
    %268 = arith.truncf %258 : vector<8x128xf32> to vector<8x128xbf16>
    %cst_83 = arith.constant dense<0.000000e+00> : vector<8x384xf32>
    %269 = tpu.matmul %268, %4, %cst_83 {dimension_numbers = #tpu.dot_dimension_numbers<[1], [0], [0], [1], [0, 0, 1, 1], [], []>} : vector<8x128xbf16>, vector<128x384xbf16>, vector<8x384xf32> -> vector<8x384xf32>
    %270 = vector.broadcast %5 : vector<1x384xf32> to vector<8x384xf32>
    %271 = arith.addf %269, %270 : vector<8x384xf32>
    %272 = vector.extract_strided_slice %265 {offsets = [0, 0], sizes = [8, 128], strides = [1, 1]} : vector<8x384xf32> to vector<8x128xf32>
    %273 = vector.extract_strided_slice %271 {offsets = [0, 0], sizes = [8, 128], strides = [1, 1]} : vector<8x384xf32> to vector<8x128xf32>
    %274 = arith.addf %272, %273 : vector<8x128xf32>
    %275 = arith.negf %274 : vector<8x128xf32>
    %276 = math.exp %275 : vector<8x128xf32>
    %cst_84 = arith.constant 1.000000e+00 : f32
    %277 = vector.broadcast %cst_84 : f32 to vector<8x128xf32>
    %278 = arith.addf %277, %276 : vector<8x128xf32>
    %279 = arith.divf %277, %278 : vector<8x128xf32>
    %280 = vector.extract_strided_slice %265 {offsets = [0, 128], sizes = [8, 128], strides = [1, 1]} : vector<8x384xf32> to vector<8x128xf32>
    %281 = vector.extract_strided_slice %271 {offsets = [0, 128], sizes = [8, 128], strides = [1, 1]} : vector<8x384xf32> to vector<8x128xf32>
    %282 = arith.addf %280, %281 : vector<8x128xf32>
    %283 = arith.negf %282 : vector<8x128xf32>
    %284 = math.exp %283 : vector<8x128xf32>
    %cst_85 = arith.constant 1.000000e+00 : f32
    %285 = vector.broadcast %cst_85 : f32 to vector<8x128xf32>
    %286 = arith.addf %285, %284 : vector<8x128xf32>
    %287 = arith.divf %285, %286 : vector<8x128xf32>
    %288 = vector.extract_strided_slice %265 {offsets = [0, 256], sizes = [8, 128], strides = [1, 1]} : vector<8x384xf32> to vector<8x128xf32>
    %289 = vector.extract_strided_slice %271 {offsets = [0, 256], sizes = [8, 128], strides = [1, 1]} : vector<8x384xf32> to vector<8x128xf32>
    %290 = arith.mulf %279, %289 : vector<8x128xf32>
    %291 = arith.addf %288, %290 : vector<8x128xf32>
    %292 = math.tanh %291 : vector<8x128xf32>
    %cst_86 = arith.constant 1.000000e+00 : f32
    %293 = vector.broadcast %cst_86 : f32 to vector<8x128xf32>
    %294 = arith.subf %293, %287 : vector<8x128xf32>
    %295 = arith.mulf %294, %292 : vector<8x128xf32>
    %296 = arith.mulf %287, %258 : vector<8x128xf32>
    %297 = arith.addf %295, %296 : vector<8x128xf32>
    %298 = arith.subf %297, %258 : vector<8x128xf32>
    %299 = vector.broadcast %267 : vector<8x1xf32> to vector<8x128xf32>
    %300 = arith.mulf %299, %298 : vector<8x128xf32>
    %301 = arith.addf %258, %300 : vector<8x128xf32>
    %302 = vector.broadcast %267 : vector<8x1xf32> to vector<8x128xf32>
    %303 = arith.mulf %302, %301 : vector<8x128xf32>
    %c6_87 = arith.constant 6 : index
    %c0_88 = arith.constant 0 : index
    %c0_89 = arith.constant 0 : index
    %304 = vector.load %arg6[%c6_87, %c0_88, %c0_89] : memref<8x8x128xf32, #tpu.memory_space<vmem>>, vector<1x8x128xf32>
    %305 = vector.shape_cast %304 : vector<1x8x128xf32> to vector<8x128xf32>
    %306 = vector.shape_cast %303 : vector<8x128xf32> to vector<1x8x128xf32>
    tpu.vector_store %arg6[%c6_87, %c0_88, %c0_89], %306 {strides = array<i32>} : memref<8x8x128xf32, #tpu.memory_space<vmem>>, vector<1x8x128xf32>,
    %c7 = arith.constant 7 : index
    %c0_90 = arith.constant 0 : index
    %c0_91 = arith.constant 0 : index
    %307 = vector.load %arg3[%c7, %c0_90, %c0_91] : memref<8x8x384xf32, #tpu.memory_space<vmem>>, vector<1x8x384xf32>
    %308 = vector.shape_cast %307 : vector<1x8x384xf32> to vector<8x384xf32>
    %c7_92 = arith.constant 7 : index
    %c0_93 = arith.constant 0 : index
    %c0_94 = arith.constant 0 : index
    %309 = vector.load %arg2[%c7_92, %c0_93, %c0_94] : memref<8x8x1xf32, #tpu.memory_space<vmem>>, vector<1x8x1xf32>
    %310 = vector.shape_cast %309 : vector<1x8x1xf32> to vector<8x1xf32>
    %311 = arith.truncf %301 : vector<8x128xf32> to vector<8x128xbf16>
    %cst_95 = arith.constant dense<0.000000e+00> : vector<8x384xf32>
    %312 = tpu.matmul %311, %4, %cst_95 {dimension_numbers = #tpu.dot_dimension_numbers<[1], [0], [0], [1], [0, 0, 1, 1], [], []>} : vector<8x128xbf16>, vector<128x384xbf16>, vector<8x384xf32> -> vector<8x384xf32>
    %313 = vector.broadcast %5 : vector<1x384xf32> to vector<8x384xf32>
    %314 = arith.addf %312, %313 : vector<8x384xf32>
    %315 = vector.extract_strided_slice %308 {offsets = [0, 0], sizes = [8, 128], strides = [1, 1]} : vector<8x384xf32> to vector<8x128xf32>
    %316 = vector.extract_strided_slice %314 {offsets = [0, 0], sizes = [8, 128], strides = [1, 1]} : vector<8x384xf32> to vector<8x128xf32>
    %317 = arith.addf %315, %316 : vector<8x128xf32>
    %318 = arith.negf %317 : vector<8x128xf32>
    %319 = math.exp %318 : vector<8x128xf32>
    %cst_96 = arith.constant 1.000000e+00 : f32
    %320 = vector.broadcast %cst_96 : f32 to vector<8x128xf32>
    %321 = arith.addf %320, %319 : vector<8x128xf32>
    %322 = arith.divf %320, %321 : vector<8x128xf32>
    %323 = vector.extract_strided_slice %308 {offsets = [0, 128], sizes = [8, 128], strides = [1, 1]} : vector<8x384xf32> to vector<8x128xf32>
    %324 = vector.extract_strided_slice %314 {offsets = [0, 128], sizes = [8, 128], strides = [1, 1]} : vector<8x384xf32> to vector<8x128xf32>
    %325 = arith.addf %323, %324 : vector<8x128xf32>
    %326 = arith.negf %325 : vector<8x128xf32>
    %327 = math.exp %326 : vector<8x128xf32>
    %cst_97 = arith.constant 1.000000e+00 : f32
    %328 = vector.broadcast %cst_97 : f32 to vector<8x128xf32>
    %329 = arith.addf %328, %327 : vector<8x128xf32>
    %330 = arith.divf %328, %329 : vector<8x128xf32>
    %331 = vector.extract_strided_slice %308 {offsets = [0, 256], sizes = [8, 128], strides = [1, 1]} : vector<8x384xf32> to vector<8x128xf32>
    %332 = vector.extract_strided_slice %314 {offsets = [0, 256], sizes = [8, 128], strides = [1, 1]} : vector<8x384xf32> to vector<8x128xf32>
    %333 = arith.mulf %322, %332 : vector<8x128xf32>
    %334 = arith.addf %331, %333 : vector<8x128xf32>
    %335 = math.tanh %334 : vector<8x128xf32>
    %cst_98 = arith.constant 1.000000e+00 : f32
    %336 = vector.broadcast %cst_98 : f32 to vector<8x128xf32>
    %337 = arith.subf %336, %330 : vector<8x128xf32>
    %338 = arith.mulf %337, %335 : vector<8x128xf32>
    %339 = arith.mulf %330, %301 : vector<8x128xf32>
    %340 = arith.addf %338, %339 : vector<8x128xf32>
    %341 = arith.subf %340, %301 : vector<8x128xf32>
    %342 = vector.broadcast %310 : vector<8x1xf32> to vector<8x128xf32>
    %343 = arith.mulf %342, %341 : vector<8x128xf32>
    %344 = arith.addf %301, %343 : vector<8x128xf32>
    %345 = vector.broadcast %310 : vector<8x1xf32> to vector<8x128xf32>
    %346 = arith.mulf %345, %344 : vector<8x128xf32>
    %c7_99 = arith.constant 7 : index
    %c0_100 = arith.constant 0 : index
    %c0_101 = arith.constant 0 : index
    %347 = vector.load %arg6[%c7_99, %c0_100, %c0_101] : memref<8x8x128xf32, #tpu.memory_space<vmem>>, vector<1x8x128xf32>
    %348 = vector.shape_cast %347 : vector<1x8x128xf32> to vector<8x128xf32>
    %349 = vector.shape_cast %346 : vector<8x128xf32> to vector<1x8x128xf32>
    tpu.vector_store %arg6[%c7_99, %c0_100, %c0_101], %349 {strides = array<i32>} : memref<8x8x128xf32, #tpu.memory_space<vmem>>, vector<1x8x128xf32>,
    %c0_102 = arith.constant 0 : index
    %c0_103 = arith.constant 0 : index
    %350 = vector.load %arg8[%c0_102, %c0_103] : memref<8x128xf32, #tpu.memory_space<vmem>>, vector<8x128xf32>
    tpu.vector_store %arg8[%c0_102, %c0_103], %344 {strides = array<i32>} : memref<8x128xf32, #tpu.memory_space<vmem>>, vector<8x128xf32>,
    %c0_i32_104 = arith.constant 0 : i32
    %351 = arith.cmpi eq, %arg1, %c0_i32_104 : i32
    %352 = arith.extui %351 : i1 to i32
    %c0_i32_105 = arith.constant 0 : i32
    %353 = arith.cmpi ne, %352, %c0_i32_105 : i32
    scf.if %353 {
      %c0_106 = arith.constant 0 : index
      %c0_107 = arith.constant 0 : index
      %354 = vector.load %arg7[%c0_106, %c0_107] : memref<8x128xf32, #tpu.memory_space<vmem>>, vector<8x128xf32>
      tpu.vector_store %arg7[%c0_106, %c0_107], %344 {strides = array<i32>} : memref<8x128xf32, #tpu.memory_space<vmem>>, vector<8x128xf32>,
    } else {
    }
    return
  }
  func.func @transform_0(%arg0: i32, %arg1: i32) -> (i32, i32, i32) {
    %c0_i32 = arith.constant 0 : i32
    %c0_i32_0 = arith.constant 0 : i32
    return %arg1, %arg0, %c0_i32 : i32, i32, i32
  }
  func.func @transform_1(%arg0: i32, %arg1: i32) -> (i32, i32, i32) {
    %c0_i32 = arith.constant 0 : i32
    %c0_i32_0 = arith.constant 0 : i32
    return %arg1, %arg0, %c0_i32 : i32, i32, i32
  }
  func.func @transform_2(%arg0: i32, %arg1: i32) -> (i32, i32) {
    %c0_i32 = arith.constant 0 : i32
    %c0_i32_0 = arith.constant 0 : i32
    %c0_i32_1 = arith.constant 0 : i32
    return %c0_i32, %c0_i32_0 : i32, i32
  }
  func.func @transform_3(%arg0: i32, %arg1: i32) -> (i32, i32) {
    %c0_i32 = arith.constant 0 : i32
    %c0_i32_0 = arith.constant 0 : i32
    %c0_i32_1 = arith.constant 0 : i32
    return %c0_i32, %c0_i32_0 : i32, i32
  }
  func.func @transform_4(%arg0: i32, %arg1: i32) -> (i32, i32, i32) {
    %c0_i32 = arith.constant 0 : i32
    %c0_i32_0 = arith.constant 0 : i32
    return %arg1, %arg0, %c0_i32 : i32, i32, i32
  }
  func.func @transform_5(%arg0: i32, %arg1: i32) -> (i32, i32) {
    %c0_i32 = arith.constant 0 : i32
    %c0_i32_0 = arith.constant 0 : i32
    return %arg0, %c0_i32 : i32, i32
  }
}

</mosaic_0001>

<llo_original>
// kernel: tpu_custom_call.1
$region0: #{tpu_custom_call.1}
  #allocation0 [shape = 'u32[]', space=smem, size = 0x4, offset = 0x4, fixed_abs, tag = 'smem constant byte address 0x4 - core index']
  #allocation1 [shape = 'u32[144,128]{1,0:T(1,128)}', space=vmem, size = 0x12000, scoped, tag = 'internal scratch']
  #allocation2 [shape = 'f32[8,128]{1,0:T(8,128)}', space=vmem, size = 0x1000, scoped, tag = 'scratch operand']
  %s0 = inlined_call_operand.vmem [shape: f32[8,8,1], index: 0, kind: input, shape index: {}]
  %s1 = inlined_call_operand.hbm [shape: f32[8,8,384], index: 1, kind: input, shape index: {}]
  %s2 = inlined_call_operand.hbm [shape: bf16[128,384], index: 2, kind: input, shape index: {}]
  %s3 = inlined_call_operand.vmem [shape: f32[1,384], index: 3, kind: input, shape index: {}]
  %s4 = inlined_call_operand.hbm [shape: f32[8,8,128], index: 4, kind: output, shape index: {0}]
  %s5 = inlined_call_operand.hbm [shape: f32[8,128], index: 5, kind: output, shape index: {1}]
  %6 = xla_tuple %s4, %s5
  %s7 = sld [smem:[#allocation0]]
  $region50: #{tpu_custom_call.1} parent=0
    _
  %s9 = ssub.s32 1, %s7
  %s10 = scalar_select 0, %s9, %s7
  $region1: #{tpu_custom_call.1} parent=0
    #allocation3 [shape = 'u8[98304]{0}', space=vmem, size = 0x18000, scoped, tag = 'input window, operand 1, single buffered']
    #allocation4 [shape = 's32[1]{0}', space=sflag, size = 0x4, scoped, tag = 'scoped memory for tpu_custom_call.1']
    #allocation5 [shape = 's32[1]{0}', space=sflag, size = 0x4, scoped, tag = 'scoped memory for tpu_custom_call.1']
    #allocation6 [shape = 'u8[98304]{0}', space=vmem, size = 0x18000, scoped, tag = 'input window, operand 2, single buffered']
    #allocation7 [shape = 's32[1]{0}', space=sflag, size = 0x4, scoped, tag = 'scoped memory for tpu_custom_call.1']
    #allocation8 [shape = 'u8[32768]{0}', space=vmem, size = 0x8000, scoped, tag = 'output window, operand 0, single buffered']
    #allocation9 [shape = 'u8[4096]{0}', space=vmem, size = 0x1000, scoped, tag = 'output window, operand 1, single buffered']
    #allocation10 [shape = 's32[1]{0}', space=sflag, size = 0x4, scoped, tag = 'scoped memory for tpu_custom_call.1']
    %11 = vsyncpa [#allocation4], 0
    %12 = vsyncpa [#allocation7], 0
    %13 = vsyncpa [#allocation5], 0
    %14 = vsyncpa [#allocation10], 0
    // Predicated region
    $region2: #{tpu_custom_call.1} parent=1 // pred_check
      _
    $region3: #{tpu_custom_call.1} parent=1 // pred_check_branch
      %16 = sbr.rel (0) target = $region5
    $region4: #{tpu_custom_call.1} parent=1 // pred_region
      _
    $region5: #{tpu_custom_call.1} parent=1 // pred_fallthru
      _
    // Predicated region
    $region6: #{tpu_custom_call.1} parent=1 // pred_check
      _
    $region7: #{tpu_custom_call.1} parent=1 // pred_check_branch
      %18 = sbr.rel (0) target = $region9
    $region8: #{tpu_custom_call.1} parent=1 // pred_region
      %s20 = ssub.s32 3072, 3072
      %21 = vsyncadd [#allocation4], %s20
      %s22 = sshll.u32 [#allocation3], 4
      %s23 = int_to_ptr.vmem [resolvable:$true] %s22
      %28 = dma.hbm_to_vmem [thread:$0]  %s1, 3072, %s23, [#allocation4], 384, 384, 24
    $region9: #{tpu_custom_call.1} parent=1 // pred_fallthru
      _
    // Predicated region
    $region10: #{tpu_custom_call.1} parent=1 // pred_check
      _
    $region11: #{tpu_custom_call.1} parent=1 // pred_check_branch
      %30 = sbr.rel (0) target = $region13
    $region12: #{tpu_custom_call.1} parent=1 // pred_region
      %s32 = ssub.s32 3072, 3072
      %33 = vsyncadd [#allocation7], %s32
      %s34 = sshll.u32 [#allocation6], 4
      %s35 = int_to_ptr.vmem [resolvable:$true] %s34
      %40 = dma.hbm_to_vmem [thread:$0]  %s2, 3072, %s35, [#allocation7], 192, 192, 12
    $region13: #{tpu_custom_call.1} parent=1 // pred_fallthru
      _
    // Predicated region
    $region14: #{tpu_custom_call.1} parent=1 // pred_check
      _
    $region15: #{tpu_custom_call.1} parent=1 // pred_check_branch
      %42 = sbr.rel (0) target = $region17
    $region16: #{tpu_custom_call.1} parent=1 // pred_region
      _
    $region17: #{tpu_custom_call.1} parent=1 // pred_fallthru
      _
    // Predicated region
    $region18: #{tpu_custom_call.1} parent=1 // pred_check
      _
    $region19: #{tpu_custom_call.1} parent=1 // pred_check_branch
      %44 = sbr.rel (0) target = $region21
    $region20: #{tpu_custom_call.1} parent=1 // pred_region
      %45 = dma.done [#allocation4], 3072
    $region21: #{tpu_custom_call.1} parent=1 // pred_fallthru
      _
    // Predicated region
    $region22: #{tpu_custom_call.1} parent=1 // pred_check
      _
    $region23: #{tpu_custom_call.1} parent=1 // pred_check_branch
      %47 = sbr.rel (0) target = $region25
    $region24: #{tpu_custom_call.1} parent=1 // pred_region
      %48 = dma.done [#allocation7], 3072
    $region25: #{tpu_custom_call.1} parent=1 // pred_fallthru
      _
    %p50 = scmp.eq.s32.totalorder 0, 0
    // Predicated region
    $region26: #{tpu_custom_call.1} parent=1 // pred_check
      %p51 = pneg %p50
    $region27: #{tpu_custom_call.1} parent=1 // pred_check_branch
      %53 = sbr.rel (%p51) target = $region29
    $region28: #{tpu_custom_call.1} parent=1 // pred_region
      %54 = vst [vmem:[#allocation2] sm:$0xff] 0.0
    $region29: #{tpu_custom_call.1} parent=1 // pred_fallthru
      _
    %v55 = vld [vmem:[#allocation2] sm:$0xff]
    %v56 = vld [vmem:[#allocation6] sm:$0xff]
    %v57 = vld [vmem:[#allocation6 + $0x8] sm:$0xf]
    %v58 = vld [vmem:[#allocation6 + $0xc] sm:$0xff]
    %v59 = vld [vmem:[#allocation6 + $0x14] sm:$0xf]
    %v60 = vld [vmem:[#allocation6 + $0x18] sm:$0xff]
    %v61 = vld [vmem:[#allocation6 + $0x20] sm:$0xf]
    %v62 = vld [vmem:[#allocation6 + $0x24] sm:$0xff]
    %v63 = vld [vmem:[#allocation6 + $0x2c] sm:$0xf]
    %v64 = vld [vmem:[#allocation6 + $0x30] sm:$0xff]
    %v65 = vld [vmem:[#allocation6 + $0x38] sm:$0xf]
    %v66 = vld [vmem:[#allocation6 + $0x3c] sm:$0xff]
    %v67 = vld [vmem:[#allocation6 + $0x44] sm:$0xf]
    %v68 = vld [vmem:[#allocation6 + $0x48] sm:$0xff]
    %v69 = vld [vmem:[#allocation6 + $0x50] sm:$0xf]
    %v70 = vld [vmem:[#allocation6 + $0x54] sm:$0xff]
    %v71 = vld [vmem:[#allocation6 + $0x5c] sm:$0xf]
    %v72 = vld [vmem:[#allocation6 + $0x60] sm:$0xff]
    %v73 = vld [vmem:[#allocation6 + $0x68] sm:$0xf]
    %v74 = vld [vmem:[#allocation6 + $0x6c] sm:$0xff]
    %v75 = vld [vmem:[#allocation6 + $0x74] sm:$0xf]
    %v76 = vld [vmem:[#allocation6 + $0x78] sm:$0xff]
    %v77 = vld [vmem:[#allocation6 + $0x80] sm:$0xf]
    %v78 = vld [vmem:[#allocation6 + $0x84] sm:$0xff]
    %v79 = vld [vmem:[#allocation6 + $0x8c] sm:$0xf]
    %v80 = vld [vmem:[#allocation6 + $0x90] sm:$0xff]
    %v81 = vld [vmem:[#allocation6 + $0x98] sm:$0xf]
    %v82 = vld [vmem:[#allocation6 + $0x9c] sm:$0xff]
    %v83 = vld [vmem:[#allocation6 + $0xa4] sm:$0xf]
    %v84 = vld [vmem:[#allocation6 + $0xa8] sm:$0xff]
    %v85 = vld [vmem:[#allocation6 + $0xb0] sm:$0xf]
    %v86 = vld [vmem:[#allocation6 + $0xb4] sm:$0xff]
    %v87 = vld [vmem:[#allocation6 + $0xbc] sm:$0xf]
    %v88 = vld [vmem:[%s3] sm:$0x7]
    %v89 = vld [vmem:[#allocation3] sm:$0xff]
    %v90 = vld [vmem:[#allocation3 + $0x8] sm:$0xff]
    %v91 = vld [vmem:[#allocation3 + $0x10] sm:$0xff]
    %v92 = vld [vmem:[%s0] sm:$0xff]
    %v93 = vpack.c.bf16 %v55, %v55
    %v95 = vlaneseq
    %v96 = vshrl.u32 %v95, 7
    %v97 = vsub.s32 0, %v96
    %v98 = vrot.slane %v88, %v97
    %v99 = vlaneseq
    %v100 = vshrl.u32 %v99, 7
    %v101 = vsub.s32 1, %v100
    %v102 = vrot.slane %v88, %v101
    %v103 = vlaneseq
    %v104 = vshrl.u32 %v103, 7
    %v105 = vsub.s32 2, %v104
    %v106 = vrot.slane %v88, %v105
    %v142 = vunpack.c.l.b16 %v56
    %v143 = vunpack.c.h.b16 %v56
    %v144 = vunpack.c.l.b16 %v57
    %v145 = vunpack.c.l.b16 %v58
    %v146 = vunpack.c.h.b16 %v58
    %v147 = vunpack.c.l.b16 %v59
    %v148 = vunpack.c.l.b16 %v60
    %v149 = vunpack.c.h.b16 %v60
    %v150 = vunpack.c.l.b16 %v61
    %v151 = vunpack.c.l.b16 %v62
    %v152 = vunpack.c.h.b16 %v62
    %v153 = vunpack.c.l.b16 %v63
    %v154 = vunpack.c.l.b16 %v64
    %v155 = vunpack.c.h.b16 %v64
    %v156 = vunpack.c.l.b16 %v65
    %v157 = vunpack.c.l.b16 %v66
    %v158 = vunpack.c.h.b16 %v66
    %v159 = vunpack.c.l.b16 %v67
    %v160 = vunpack.c.l.b16 %v68
    %v161 = vunpack.c.h.b16 %v68
    %v162 = vunpack.c.l.b16 %v69
    %v163 = vunpack.c.l.b16 %v70
    %v164 = vunpack.c.h.b16 %v70
    %v165 = vunpack.c.l.b16 %v71
    %v166 = vunpack.c.l.b16 %v72
    %v167 = vunpack.c.h.b16 %v72
    %v168 = vunpack.c.l.b16 %v73
    %v169 = vunpack.c.l.b16 %v74
    %v170 = vunpack.c.h.b16 %v74
    %v171 = vunpack.c.l.b16 %v75
    %v172 = vunpack.c.l.b16 %v76
    %v173 = vunpack.c.h.b16 %v76
    %v174 = vunpack.c.l.b16 %v77
    %v175 = vunpack.c.l.b16 %v78
    %v176 = vunpack.c.h.b16 %v78
    %v177 = vunpack.c.l.b16 %v79
    %v178 = vunpack.c.l.b16 %v80
    %v179 = vunpack.c.h.b16 %v80
    %v180 = vunpack.c.l.b16 %v81
    %v181 = vunpack.c.l.b16 %v82
    %v182 = vunpack.c.h.b16 %v82
    %v183 = vunpack.c.l.b16 %v83
    %v184 = vunpack.c.l.b16 %v84
    %v185 = vunpack.c.h.b16 %v84
    %v186 = vunpack.c.l.b16 %v85
    %v187 = vunpack.c.l.b16 %v86
    %v188 = vunpack.c.h.b16 %v86
    %v189 = vunpack.c.l.b16 %v87
    %v190 = vpack.c.b16 %v145, %v142
    %v191 = vpack.c.b16 %v146, %v143
    %v192 = vpack.c.b16 %v147, %v144
    %v193 = vpack.c.b16 %v151, %v148
    %v194 = vpack.c.b16 %v152, %v149
    %v195 = vpack.c.b16 %v153, %v150
    %v196 = vpack.c.b16 %v157, %v154
    %v197 = vpack.c.b16 %v158, %v155
    %v198 = vpack.c.b16 %v159, %v156
    %v199 = vpack.c.b16 %v163, %v160
    %v200 = vpack.c.b16 %v164, %v161
    %v201 = vpack.c.b16 %v165, %v162
    %v202 = vpack.c.b16 %v169, %v166
    %v203 = vpack.c.b16 %v170, %v167
    %v204 = vpack.c.b16 %v171, %v168
    %v205 = vpack.c.b16 %v175, %v172
    %v206 = vpack.c.b16 %v176, %v173
    %v207 = vpack.c.b16 %v177, %v174
    %v208 = vpack.c.b16 %v181, %v178
    %v209 = vpack.c.b16 %v182, %v179
    %v210 = vpack.c.b16 %v183, %v180
    %v211 = vpack.c.b16 %v187, %v184
    %v212 = vpack.c.b16 %v188, %v185
    %v213 = vpack.c.b16 %v189, %v186
    %238 = vmatprep.subr.bf16.mxu0 %v212
    %239 = vmatpush1.bf16.msra.mxu0 %v211
    %240 = vmatprep.subr.bf16.mxu0 %v209
    %241 = vmatpush1.bf16.msra.mxu0 %v208
    %242 = vmatprep.subr.bf16.mxu0 %v206
    %243 = vmatpush1.bf16.msra.mxu0 %v205
    %244 = vmatprep.subr.bf16.mxu0 %v203
    %245 = vmatpush1.bf16.msra.mxu0 %v202
    %246 = vmatprep.subr.bf16.mxu0 %v200
    %247 = vmatpush1.bf16.msra.mxu0 %v199
    %248 = vmatprep.subr.bf16.mxu0 %v197
    %249 = vmatpush1.bf16.msra.mxu0 %v196
    %250 = vmatprep.subr.bf16.mxu0 %v194
    %251 = vmatpush1.bf16.msra.mxu0 %v193
    %252 = vmatprep.subr.bf16.mxu0 %v191
    %253 = vmatpush1.bf16.msra.mxu0 %v190
    %254 = vmatprep.subr.bf16.mxu0 0
    %255 = vmatpush2.bf16.msra.mxu0 0
    %256 = vmatprep.subr.bf16.mxu0 0
    %257 = vmatpush2.bf16.msra.mxu0 0
    %258 = vmatprep.subr.bf16.mxu0 0
    %259 = vmatpush2.bf16.msra.mxu0 0
    %260 = vmatprep.subr.bf16.mxu0 0
    %261 = vmatpush2.bf16.msra.mxu0 0
    %262 = vmatprep.subr.bf16.mxu0 0
    %263 = vmatpush2.bf16.msra.mxu0 0
    %264 = vmatprep.subr.bf16.mxu0 0
    %265 = vmatpush2.bf16.msra.mxu0 0
    %266 = vmatprep.subr.bf16.mxu0 0
    %267 = vmatpush2.bf16.msra.mxu0 0
    %268 = vmatprep.subr.bf16.mxu0 0
    %269 = vmatpush2.bf16.msra.mxu0 0
    %270 = vmatprep.mubr.bf16.mxu0 0
    %271 = vmatmul.mubr.bf16.gmra.mxu0 %v93
    %v272 = vpop.f32.mrf.mxu0
    %v273 = vadd.f32 %v98, %v272
    %v274 = vpop.f32.mrf.mxu0
    %v275 = vadd.f32 %v102, %v274
    %v276 = vpop.f32.mrf.mxu0
    %v277 = vpop.f32.mrf.mxu0
    %278 = vdwg.mxu0
    %279 = vmatprep.subr.bf16.mxu0 0
    %280 = vmatpush1.bf16.msra.mxu0 %v213
    %281 = vmatprep.subr.bf16.mxu0 0
    %282 = vmatpush1.bf16.msra.mxu0 %v210
    %283 = vmatprep.subr.bf16.mxu0 0
    %284 = vmatpush1.bf16.msra.mxu0 %v207
    %285 = vmatprep.subr.bf16.mxu0 0
    %286 = vmatpush1.bf16.msra.mxu0 %v204
    %287 = vmatprep.subr.bf16.mxu0 0
    %288 = vmatpush1.bf16.msra.mxu0 %v201
    %289 = vmatprep.subr.bf16.mxu0 0
    %290 = vmatpush1.bf16.msra.mxu0 %v198
    %291 = vmatprep.subr.bf16.mxu0 0
    %292 = vmatpush1.bf16.msra.mxu0 %v195
    %293 = vmatprep.subr.bf16.mxu0 0
    %294 = vmatpush1.bf16.msra.mxu0 %v192
    %295 = vmatprep.subr.bf16.mxu0 0
    %296 = vmatpush2.bf16.msra.mxu0 0
    %297 = vmatprep.subr.bf16.mxu0 0
    %298 = vmatpush2.bf16.msra.mxu0 0
    %299 = vmatprep.subr.bf16.mxu0 0
    %300 = vmatpush2.bf16.msra.mxu0 0
    %301 = vmatprep.subr.bf16.mxu0 0
    %302 = vmatpush2.bf16.msra.mxu0 0
    %303 = vmatprep.subr.bf16.mxu0 0
    %304 = vmatpush2.bf16.msra.mxu0 0
    %305 = vmatprep.subr.bf16.mxu0 0
    %306 = vmatpush2.bf16.msra.mxu0 0
    %307 = vmatprep.subr.bf16.mxu0 0
    %308 = vmatpush2.bf16.msra.mxu0 0
    %309 = vmatprep.subr.bf16.mxu0 0
    %310 = vmatpush2.bf16.msra.mxu0 0
    %311 = vmatprep.mubr.bf16.mxu0 0
    %312 = vmatmul.mubr.bf16.gmra.mxu0 %v93
    %v313 = vpop.f32.mrf.mxu0
    %v314 = vadd.f32 %v106, %v313
    %v315 = vpop.f32.mrf.mxu0
    %v316 = vpop.f32.mrf.mxu0
    %v317 = vpop.f32.mrf.mxu0
    %318 = vdwg.mxu0
    %v319 = vadd.f32 %v89, %v273
    %v320 = vxor.u32 %v319, 2147483648
    %v321 = vmul.f32 %v320, 1.442695
    %v322 = vpow.pop %v321
    %v323 = vadd.f32 %v322, 1.0
    %v324 = vrcp.pop %v323
    %v325 = vmul.f32 1.0, %v324
    %v326 = vadd.f32 %v90, %v275
    %v327 = vxor.u32 %v326, 2147483648
    %v328 = vmul.f32 %v327, 1.442695
    %v329 = vpow.pop %v328
    %v330 = vadd.f32 %v329, 1.0
    %v331 = vrcp.pop %v330
    %v332 = vmul.f32 1.0, %v331
    %v333 = vmul.f32 %v325, %v314
    %v334 = vadd.f32 %v91, %v333
    %v335 = vtanh.pop %v334
    %v336 = vsub.f32 1.0, %v332
    %v337 = vmul.f32 %v336, %v335
    %v338 = vmul.f32 %v332, %v55
    %v339 = vadd.f32 %v337, %v338
    %v340 = vsub.f32 %v339, %v55
    %342 = vset.pattern.permute.xlu0 0
    %343 = vperm.xlu0 %342, %v92
    %v344 = vpop.permute.xlu0 %343
    %v346 = vmul.f32 %v344, %v340
    %v347 = vadd.f32 %v55, %v346
    %v348 = vmul.f32 %v344, %v347
    %349 = vst [vmem:[#allocation8] sm:$0xff] %v348
    %s350 = scalar_lea.vmem [#allocation3], 24
    %v351 = vld [vmem:[%s350] sm:$0xff]
    %v352 = vld [vmem:[%s350 + $0x8] sm:$0xff]
    %v353 = vld [vmem:[%s350 + $0x10] sm:$0xff]
    %s354 = scalar_lea.vmem %s0, 8
    %v355 = vld [vmem:[%s354] sm:$0xff]
    %v356 = vpack.c.bf16 %v347, %v347
    %357 = vmatprep.subr.bf16.mxu0 %v212
    %358 = vmatpush1.bf16.msra.mxu0 %v211
    %359 = vmatprep.subr.bf16.mxu0 %v209
    %360 = vmatpush1.bf16.msra.mxu0 %v208
    %361 = vmatprep.subr.bf16.mxu0 %v206
    %362 = vmatpush1.bf16.msra.mxu0 %v205
    %363 = vmatprep.subr.bf16.mxu0 %v203
    %364 = vmatpush1.bf16.msra.mxu0 %v202
    %365 = vmatprep.subr.bf16.mxu0 %v200
    %366 = vmatpush1.bf16.msra.mxu0 %v199
    %367 = vmatprep.subr.bf16.mxu0 %v197
    %368 = vmatpush1.bf16.msra.mxu0 %v196
    %369 = vmatprep.subr.bf16.mxu0 %v194
    %370 = vmatpush1.bf16.msra.mxu0 %v193
    %371 = vmatprep.subr.bf16.mxu0 %v191
    %372 = vmatpush1.bf16.msra.mxu0 %v190
    %373 = vmatprep.subr.bf16.mxu0 0
    %374 = vmatpush2.bf16.msra.mxu0 0
    %375 = vmatprep.subr.bf16.mxu0 0
    %376 = vmatpush2.bf16.msra.mxu0 0
    %377 = vmatprep.subr.bf16.mxu0 0
    %378 = vmatpush2.bf16.msra.mxu0 0
    %379 = vmatprep.subr.bf16.mxu0 0
    %380 = vmatpush2.bf16.msra.mxu0 0
    %381 = vmatprep.subr.bf16.mxu0 0
    %382 = vmatpush2.bf16.msra.mxu0 0
    %383 = vmatprep.subr.bf16.mxu0 0
    %384 = vmatpush2.bf16.msra.mxu0 0
    %385 = vmatprep.subr.bf16.mxu0 0
    %386 = vmatpush2.bf16.msra.mxu0 0
    %387 = vmatprep.subr.bf16.mxu0 0
    %388 = vmatpush2.bf16.msra.mxu0 0
    %389 = vmatprep.mubr.bf16.mxu0 0
    %390 = vmatmul.mubr.bf16.gmra.mxu0 %v356
    %v391 = vpop.f32.mrf.mxu0
    %v392 = vadd.f32 %v98, %v391
    %v393 = vpop.f32.mrf.mxu0
    %v394 = vadd.f32 %v102, %v393
    %v395 = vpop.f32.mrf.mxu0
    %v396 = vpop.f32.mrf.mxu0
    %397 = vdwg.mxu0
    %398 = vmatprep.subr.bf16.mxu0 0
    %399 = vmatpush1.bf16.msra.mxu0 %v213
    %400 = vmatprep.subr.bf16.mxu0 0
    %401 = vmatpush1.bf16.msra.mxu0 %v210
    %402 = vmatprep.subr.bf16.mxu0 0
    %403 = vmatpush1.bf16.msra.mxu0 %v207
    %404 = vmatprep.subr.bf16.mxu0 0
    %405 = vmatpush1.bf16.msra.mxu0 %v204
    %406 = vmatprep.subr.bf16.mxu0 0
    %407 = vmatpush1.bf16.msra.mxu0 %v201
    %408 = vmatprep.subr.bf16.mxu0 0
    %409 = vmatpush1.bf16.msra.mxu0 %v198
    %410 = vmatprep.subr.bf16.mxu0 0
    %411 = vmatpush1.bf16.msra.mxu0 %v195
    %412 = vmatprep.subr.bf16.mxu0 0
    %413 = vmatpush1.bf16.msra.mxu0 %v192
    %414 = vmatprep.subr.bf16.mxu0 0
    %415 = vmatpush2.bf16.msra.mxu0 0
    %416 = vmatprep.subr.bf16.mxu0 0
    %417 = vmatpush2.bf16.msra.mxu0 0
    %418 = vmatprep.subr.bf16.mxu0 0
    %419 = vmatpush2.bf16.msra.mxu0 0
    %420 = vmatprep.subr.bf16.mxu0 0
    %421 = vmatpush2.bf16.msra.mxu0 0
    %422 = vmatprep.subr.bf16.mxu0 0
    %423 = vmatpush2.bf16.msra.mxu0 0
    %424 = vmatprep.subr.bf16.mxu0 0
    %425 = vmatpush2.bf16.msra.mxu0 0
    %426 = vmatprep.subr.bf16.mxu0 0
    %427 = vmatpush2.bf16.msra.mxu0 0
    %428 = vmatprep.subr.bf16.mxu0 0
    %429 = vmatpush2.bf16.msra.mxu0 0
    %430 = vmatprep.mubr.bf16.mxu0 0
    %431 = vmatmul.mubr.bf16.gmra.mxu0 %v356
    %v432 = vpop.f32.mrf.mxu0
    %v433 = vadd.f32 %v106, %v432
    %v434 = vpop.f32.mrf.mxu0
    %v435 = vpop.f32.mrf.mxu0
    %v436 = vpop.f32.mrf.mxu0
    %437 = vdwg.mxu0
    %v438 = vadd.f32 %v351, %v392
    %v439 = vxor.u32 %v438, 2147483648
    %v440 = vmul.f32 %v439, 1.442695
    %v441 = vpow.pop %v440
    %v442 = vadd.f32 %v441, 1.0
    %v443 = vrcp.pop %v442
    %v444 = vmul.f32 1.0, %v443
    %v445 = vadd.f32 %v352, %v394
    %v446 = vxor.u32 %v445, 2147483648
    %v447 = vmul.f32 %v446, 1.442695
    %v448 = vpow.pop %v447
    %v449 = vadd.f32 %v448, 1.0
    %v450 = vrcp.pop %v449
    %v451 = vmul.f32 1.0, %v450
    %v452 = vmul.f32 %v444, %v433
    %v453 = vadd.f32 %v353, %v452
    %v454 = vtanh.pop %v453
    %v455 = vsub.f32 1.0, %v451
    %v456 = vmul.f32 %v455, %v454
    %v457 = vmul.f32 %v451, %v347
    %v458 = vadd.f32 %v456, %v457
    %v459 = vsub.f32 %v458, %v347
    %461 = vset.pattern.permute.xlu0 0
    %462 = vperm.xlu0 %461, %v355
    %v463 = vpop.permute.xlu0 %462
    %v465 = vmul.f32 %v463, %v459
    %v466 = vadd.f32 %v347, %v465
    %v467 = vmul.f32 %v463, %v466
    %s468 = scalar_lea.vmem [#allocation8], 8
    %469 = vst [vmem:[%s468] sm:$0xff] %v467
    %s470 = scalar_lea.vmem [#allocation3], 48
    %v471 = vld [vmem:[%s470] sm:$0xff]
    %v472 = vld [vmem:[%s470 + $0x8] sm:$0xff]
    %v473 = vld [vmem:[%s470 + $0x10] sm:$0xff]
    %s474 = scalar_lea.vmem %s0, 16
    %v475 = vld [vmem:[%s474] sm:$0xff]
    %v476 = vpack.c.bf16 %v466, %v466
    %477 = vmatprep.subr.bf16.mxu0 %v212
    %478 = vmatpush1.bf16.msra.mxu0 %v211
    %479 = vmatprep.subr.bf16.mxu0 %v209
    %480 = vmatpush1.bf16.msra.mxu0 %v208
    %481 = vmatprep.subr.bf16.mxu0 %v206
    %482 = vmatpush1.bf16.msra.mxu0 %v205
    %483 = vmatprep.subr.bf16.mxu0 %v203
    %484 = vmatpush1.bf16.msra.mxu0 %v202
    %485 = vmatprep.subr.bf16.mxu0 %v200
    %486 = vmatpush1.bf16.msra.mxu0 %v199
    %487 = vmatprep.subr.bf16.mxu0 %v197
    %488 = vmatpush1.bf16.msra.mxu0 %v196
    %489 = vmatprep.subr.bf16.mxu0 %v194
    %490 = vmatpush1.bf16.msra.mxu0 %v193
    %491 = vmatprep.subr.bf16.mxu0 %v191
    %492 = vmatpush1.bf16.msra.mxu0 %v190
    %493 = vmatprep.subr.bf16.mxu0 0
    %494 = vmatpush2.bf16.msra.mxu0 0
    %495 = vmatprep.subr.bf16.mxu0 0
    %496 = vmatpush2.bf16.msra.mxu0 0
    %497 = vmatprep.subr.bf16.mxu0 0
    %498 = vmatpush2.bf16.msra.mxu0 0
    %499 = vmatprep.subr.bf16.mxu0 0
    %500 = vmatpush2.bf16.msra.mxu0 0
    %501 = vmatprep.subr.bf16.mxu0 0
    %502 = vmatpush2.bf16.msra.mxu0 0
    %503 = vmatprep.subr.bf16.mxu0 0
    %504 = vmatpush2.bf16.msra.mxu0 0
    %505 = vmatprep.subr.bf16.mxu0 0
    %506 = vmatpush2.bf16.msra.mxu0 0
    %507 = vmatprep.subr.bf16.mxu0 0
    %508 = vmatpush2.bf16.msra.mxu0 0
    %509 = vmatprep.mubr.bf16.mxu0 0
    %510 = vmatmul.mubr.bf16.gmra.mxu0 %v476
    %v511 = vpop.f32.mrf.mxu0
    %v512 = vadd.f32 %v98, %v511
    %v513 = vpop.f32.mrf.mxu0
    %v514 = vadd.f32 %v102, %v513
    %v515 = vpop.f32.mrf.mxu0
    %v516 = vpop.f32.mrf.mxu0
    %517 = vdwg.mxu0
    %518 = vmatprep.subr.bf16.mxu0 0
    %519 = vmatpush1.bf16.msra.mxu0 %v213
    %520 = vmatprep.subr.bf16.mxu0 0
    %521 = vmatpush1.bf16.msra.mxu0 %v210
    %522 = vmatprep.subr.bf16.mxu0 0
    %523 = vmatpush1.bf16.msra.mxu0 %v207
    %524 = vmatprep.subr.bf16.mxu0 0
    %525 = vmatpush1.bf16.msra.mxu0 %v204
    %526 = vmatprep.subr.bf16.mxu0 0
    %527 = vmatpush1.bf16.msra.mxu0 %v201
    %528 = vmatprep.subr.bf16.mxu0 0
    %529 = vmatpush1.bf16.msra.mxu0 %v198
    %530 = vmatprep.subr.bf16.mxu0 0
    %531 = vmatpush1.bf16.msra.mxu0 %v195
    %532 = vmatprep.subr.bf16.mxu0 0
    %533 = vmatpush1.bf16.msra.mxu0 %v192
    %534 = vmatprep.subr.bf16.mxu0 0
    %535 = vmatpush2.bf16.msra.mxu0 0
    %536 = vmatprep.subr.bf16.mxu0 0
    %537 = vmatpush2.bf16.msra.mxu0 0
    %538 = vmatprep.subr.bf16.mxu0 0
    %539 = vmatpush2.bf16.msra.mxu0 0
    %540 = vmatprep.subr.bf16.mxu0 0
    %541 = vmatpush2.bf16.msra.mxu0 0
    %542 = vmatprep.subr.bf16.mxu0 0
    %543 = vmatpush2.bf16.msra.mxu0 0
    %544 = vmatprep.subr.bf16.mxu0 0
    %545 = vmatpush2.bf16.msra.mxu0 0
    %546 = vmatprep.subr.bf16.mxu0 0
    %547 = vmatpush2.bf16.msra.mxu0 0
    %548 = vmatprep.subr.bf16.mxu0 0
    %549 = vmatpush2.bf16.msra.mxu0 0
    %550 = vmatprep.mubr.bf16.mxu0 0
    %551 = vmatmul.mubr.bf16.gmra.mxu0 %v476
    %v552 = vpop.f32.mrf.mxu0
    %v553 = vadd.f32 %v106, %v552
    %v554 = vpop.f32.mrf.mxu0
    %v555 = vpop.f32.mrf.mxu0
    %v556 = vpop.f32.mrf.mxu0
    %557 = vdwg.mxu0
    %v558 = vadd.f32 %v471, %v512
    %v559 = vxor.u32 %v558, 2147483648
    %v560 = vmul.f32 %v559, 1.442695
    %v561 = vpow.pop %v560
    %v562 = vadd.f32 %v561, 1.0
    %v563 = vrcp.pop %v562
    %v564 = vmul.f32 1.0, %v563
    %v565 = vadd.f32 %v472, %v514
    %v566 = vxor.u32 %v565, 2147483648
    %v567 = vmul.f32 %v566, 1.442695
    %v568 = vpow.pop %v567
    %v569 = vadd.f32 %v568, 1.0
    %v570 = vrcp.pop %v569
    %v571 = vmul.f32 1.0, %v570
    %v572 = vmul.f32 %v564, %v553
    %v573 = vadd.f32 %v473, %v572
    %v574 = vtanh.pop %v573
    %v575 = vsub.f32 1.0, %v571
    %v576 = vmul.f32 %v575, %v574
    %v577 = vmul.f32 %v571, %v466
    %v578 = vadd.f32 %v576, %v577
    %v579 = vsub.f32 %v578, %v466
    %581 = vset.pattern.permute.xlu0 0
    %582 = vperm.xlu0 %581, %v475
    %v583 = vpop.permute.xlu0 %582
    %v585 = vmul.f32 %v583, %v579
    %v586 = vadd.f32 %v466, %v585
    %v587 = vmul.f32 %v583, %v586
    %s588 = scalar_lea.vmem [#allocation8], 16
    %589 = vst [vmem:[%s588] sm:$0xff] %v587
    %s590 = scalar_lea.vmem [#allocation3], 72
    %v591 = vld [vmem:[%s590] sm:$0xff]
    %v592 = vld [vmem:[%s590 + $0x8] sm:$0xff]
    %v593 = vld [vmem:[%s590 + $0x10] sm:$0xff]
    %s594 = scalar_lea.vmem %s0, 24
    %v595 = vld [vmem:[%s594] sm:$0xff]
    %v596 = vpack.c.bf16 %v586, %v586
    %597 = vmatprep.subr.bf16.mxu0 %v212
    %598 = vmatpush1.bf16.msra.mxu0 %v211
    %599 = vmatprep.subr.bf16.mxu0 %v209
    %600 = vmatpush1.bf16.msra.mxu0 %v208
    %601 = vmatprep.subr.bf16.mxu0 %v206
    %602 = vmatpush1.bf16.msra.mxu0 %v205
    %603 = vmatprep.subr.bf16.mxu0 %v203
    %604 = vmatpush1.bf16.msra.mxu0 %v202
    %605 = vmatprep.subr.bf16.mxu0 %v200
    %606 = vmatpush1.bf16.msra.mxu0 %v199
    %607 = vmatprep.subr.bf16.mxu0 %v197
    %608 = vmatpush1.bf16.msra.mxu0 %v196
    %609 = vmatprep.subr.bf16.mxu0 %v194
    %610 = vmatpush1.bf16.msra.mxu0 %v193
    %611 = vmatprep.subr.bf16.mxu0 %v191
    %612 = vmatpush1.bf16.msra.mxu0 %v190
    %613 = vmatprep.subr.bf16.mxu0 0
    %614 = vmatpush2.bf16.msra.mxu0 0
    %615 = vmatprep.subr.bf16.mxu0 0
    %616 = vmatpush2.bf16.msra.mxu0 0
    %617 = vmatprep.subr.bf16.mxu0 0
    %618 = vmatpush2.bf16.msra.mxu0 0
    %619 = vmatprep.subr.bf16.mxu0 0
    %620 = vmatpush2.bf16.msra.mxu0 0
    %621 = vmatprep.subr.bf16.mxu0 0
    %622 = vmatpush2.bf16.msra.mxu0 0
    %623 = vmatprep.subr.bf16.mxu0 0
    %624 = vmatpush2.bf16.msra.mxu0 0
    %625 = vmatprep.subr.bf16.mxu0 0
    %626 = vmatpush2.bf16.msra.mxu0 0
    %627 = vmatprep.subr.bf16.mxu0 0
    %628 = vmatpush2.bf16.msra.mxu0 0
    %629 = vmatprep.mubr.bf16.mxu0 0
    %630 = vmatmul.mubr.bf16.gmra.mxu0 %v596
    %v631 = vpop.f32.mrf.mxu0
    %v632 = vadd.f32 %v98, %v631
    %v633 = vpop.f32.mrf.mxu0
    %v634 = vadd.f32 %v102, %v633
    %v635 = vpop.f32.mrf.mxu0
    %v636 = vpop.f32.mrf.mxu0
    %637 = vdwg.mxu0
    %638 = vmatprep.subr.bf16.mxu0 0
    %639 = vmatpush1.bf16.msra.mxu0 %v213
    %640 = vmatprep.subr.bf16.mxu0 0
    %641 = vmatpush1.bf16.msra.mxu0 %v210
    %642 = vmatprep.subr.bf16.mxu0 0
    %643 = vmatpush1.bf16.msra.mxu0 %v207
    %644 = vmatprep.subr.bf16.mxu0 0
    %645 = vmatpush1.bf16.msra.mxu0 %v204
    %646 = vmatprep.subr.bf16.mxu0 0
    %647 = vmatpush1.bf16.msra.mxu0 %v201
    %648 = vmatprep.subr.bf16.mxu0 0
    %649 = vmatpush1.bf16.msra.mxu0 %v198
    %650 = vmatprep.subr.bf16.mxu0 0
    %651 = vmatpush1.bf16.msra.mxu0 %v195
    %652 = vmatprep.subr.bf16.mxu0 0
    %653 = vmatpush1.bf16.msra.mxu0 %v192
    %654 = vmatprep.subr.bf16.mxu0 0
    %655 = vmatpush2.bf16.msra.mxu0 0
    %656 = vmatprep.subr.bf16.mxu0 0
    %657 = vmatpush2.bf16.msra.mxu0 0
    %658 = vmatprep.subr.bf16.mxu0 0
    %659 = vmatpush2.bf16.msra.mxu0 0
    %660 = vmatprep.subr.bf16.mxu0 0
    %661 = vmatpush2.bf16.msra.mxu0 0
    %662 = vmatprep.subr.bf16.mxu0 0
    %663 = vmatpush2.bf16.msra.mxu0 0
    %664 = vmatprep.subr.bf16.mxu0 0
    %665 = vmatpush2.bf16.msra.mxu0 0
    %666 = vmatprep.subr.bf16.mxu0 0
    %667 = vmatpush2.bf16.msra.mxu0 0
    %668 = vmatprep.subr.bf16.mxu0 0
    %669 = vmatpush2.bf16.msra.mxu0 0
    %670 = vmatprep.mubr.bf16.mxu0 0
    %671 = vmatmul.mubr.bf16.gmra.mxu0 %v596
    %v672 = vpop.f32.mrf.mxu0
    %v673 = vadd.f32 %v106, %v672
    %v674 = vpop.f32.mrf.mxu0
    %v675 = vpop.f32.mrf.mxu0
    %v676 = vpop.f32.mrf.mxu0
    %677 = vdwg.mxu0
    %v678 = vadd.f32 %v591, %v632
    %v679 = vxor.u32 %v678, 2147483648
    %v680 = vmul.f32 %v679, 1.442695
    %v681 = vpow.pop %v680
    %v682 = vadd.f32 %v681, 1.0
    %v683 = vrcp.pop %v682
    %v684 = vmul.f32 1.0, %v683
    %v685 = vadd.f32 %v592, %v634
    %v686 = vxor.u32 %v685, 2147483648
    %v687 = vmul.f32 %v686, 1.442695
    %v688 = vpow.pop %v687
    %v689 = vadd.f32 %v688, 1.0
    %v690 = vrcp.pop %v689
    %v691 = vmul.f32 1.0, %v690
    %v692 = vmul.f32 %v684, %v673
    %v693 = vadd.f32 %v593, %v692
    %v694 = vtanh.pop %v693
    %v695 = vsub.f32 1.0, %v691
    %v696 = vmul.f32 %v695, %v694
    %v697 = vmul.f32 %v691, %v586
    %v698 = vadd.f32 %v696, %v697
    %v699 = vsub.f32 %v698, %v586
    %701 = vset.pattern.permute.xlu0 0
    %702 = vperm.xlu0 %701, %v595
    %v703 = vpop.permute.xlu0 %702
    %v705 = vmul.f32 %v703, %v699
    %v706 = vadd.f32 %v586, %v705
    %v707 = vmul.f32 %v703, %v706
    %s708 = scalar_lea.vmem [#allocation8], 24
    %709 = vst [vmem:[%s708] sm:$0xff] %v707
    %s710 = scalar_lea.vmem [#allocation3], 96
    %v711 = vld [vmem:[%s710] sm:$0xff]
    %v712 = vld [vmem:[%s710 + $0x8] sm:$0xff]
    %v713 = vld [vmem:[%s710 + $0x10] sm:$0xff]
    %s714 = scalar_lea.vmem %s0, 32
    %v715 = vld [vmem:[%s714] sm:$0xff]
    %v716 = vpack.c.bf16 %v706, %v706
    %717 = vmatprep.subr.bf16.mxu0 %v212
    %718 = vmatpush1.bf16.msra.mxu0 %v211
    %719 = vmatprep.subr.bf16.mxu0 %v209
    %720 = vmatpush1.bf16.msra.mxu0 %v208
    %721 = vmatprep.subr.bf16.mxu0 %v206
    %722 = vmatpush1.bf16.msra.mxu0 %v205
    %723 = vmatprep.subr.bf16.mxu0 %v203
    %724 = vmatpush1.bf16.msra.mxu0 %v202
    %725 = vmatprep.subr.bf16.mxu0 %v200
    %726 = vmatpush1.bf16.msra.mxu0 %v199
    %727 = vmatprep.subr.bf16.mxu0 %v197
    %728 = vmatpush1.bf16.msra.mxu0 %v196
    %729 = vmatprep.subr.bf16.mxu0 %v194
    %730 = vmatpush1.bf16.msra.mxu0 %v193
    %731 = vmatprep.subr.bf16.mxu0 %v191
    %732 = vmatpush1.bf16.msra.mxu0 %v190
    %733 = vmatprep.subr.bf16.mxu0 0
    %734 = vmatpush2.bf16.msra.mxu0 0
    %735 = vmatprep.subr.bf16.mxu0 0
    %736 = vmatpush2.bf16.msra.mxu0 0
    %737 = vmatprep.subr.bf16.mxu0 0
    %738 = vmatpush2.bf16.msra.mxu0 0
    %739 = vmatprep.subr.bf16.mxu0 0
    %740 = vmatpush2.bf16.msra.mxu0 0
    %741 = vmatprep.subr.bf16.mxu0 0
    %742 = vmatpush2.bf16.msra.mxu0 0
    %743 = vmatprep.subr.bf16.mxu0 0
    %744 = vmatpush2.bf16.msra.mxu0 0
    %745 = vmatprep.subr.bf16.mxu0 0
    %746 = vmatpush2.bf16.msra.mxu0 0
    %747 = vmatprep.subr.bf16.mxu0 0
    %748 = vmatpush2.bf16.msra.mxu0 0
    %749 = vmatprep.mubr.bf16.mxu0 0
    %750 = vmatmul.mubr.bf16.gmra.mxu0 %v716
    %v751 = vpop.f32.mrf.mxu0
    %v752 = vadd.f32 %v98, %v751
    %v753 = vpop.f32.mrf.mxu0
    %v754 = vadd.f32 %v102, %v753
    %v755 = vpop.f32.mrf.mxu0
    %v756 = vpop.f32.mrf.mxu0
    %757 = vdwg.mxu0
    %758 = vmatprep.subr.bf16.mxu0 0
    %759 = vmatpush1.bf16.msra.mxu0 %v213
    %760 = vmatprep.subr.bf16.mxu0 0
    %761 = vmatpush1.bf16.msra.mxu0 %v210
    %762 = vmatprep.subr.bf16.mxu0 0
    %763 = vmatpush1.bf16.msra.mxu0 %v207
    %764 = vmatprep.subr.bf16.mxu0 0
    %765 = vmatpush1.bf16.msra.mxu0 %v204
    %766 = vmatprep.subr.bf16.mxu0 0
    %767 = vmatpush1.bf16.msra.mxu0 %v201
    %768 = vmatprep.subr.bf16.mxu0 0
    %769 = vmatpush1.bf16.msra.mxu0 %v198
    %770 = vmatprep.subr.bf16.mxu0 0
    %771 = vmatpush1.bf16.msra.mxu0 %v195
    %772 = vmatprep.subr.bf16.mxu0 0
    %773 = vmatpush1.bf16.msra.mxu0 %v192
    %774 = vmatprep.subr.bf16.mxu0 0
    %775 = vmatpush2.bf16.msra.mxu0 0
    %776 = vmatprep.subr.bf16.mxu0 0
    %777 = vmatpush2.bf16.msra.mxu0 0
    %778 = vmatprep.subr.bf16.mxu0 0
    %779 = vmatpush2.bf16.msra.mxu0 0
    %780 = vmatprep.subr.bf16.mxu0 0
    %781 = vmatpush2.bf16.msra.mxu0 0
    %782 = vmatprep.subr.bf16.mxu0 0
    %783 = vmatpush2.bf16.msra.mxu0 0
    %784 = vmatprep.subr.bf16.mxu0 0
    %785 = vmatpush2.bf16.msra.mxu0 0
    %786 = vmatprep.subr.bf16.mxu0 0
    %787 = vmatpush2.bf16.msra.mxu0 0
    %788 = vmatprep.subr.bf16.mxu0 0
    %789 = vmatpush2.bf16.msra.mxu0 0
    %790 = vmatprep.mubr.bf16.mxu0 0
    %791 = vmatmul.mubr.bf16.gmra.mxu0 %v716
    %v792 = vpop.f32.mrf.mxu0
    %v793 = vadd.f32 %v106, %v792
    %v794 = vpop.f32.mrf.mxu0
    %v795 = vpop.f32.mrf.mxu0
    %v796 = vpop.f32.mrf.mxu0
    %797 = vdwg.mxu0
    %v798 = vadd.f32 %v711, %v752
    %v799 = vxor.u32 %v798, 2147483648
    %v800 = vmul.f32 %v799, 1.442695
    %v801 = vpow.pop %v800
    %v802 = vadd.f32 %v801, 1.0
    %v803 = vrcp.pop %v802
    %v804 = vmul.f32 1.0, %v803
    %v805 = vadd.f32 %v712, %v754
    %v806 = vxor.u32 %v805, 2147483648
    %v807 = vmul.f32 %v806, 1.442695
    %v808 = vpow.pop %v807
    %v809 = vadd.f32 %v808, 1.0
    %v810 = vrcp.pop %v809
    %v811 = vmul.f32 1.0, %v810
    %v812 = vmul.f32 %v804, %v793
    %v813 = vadd.f32 %v713, %v812
    %v814 = vtanh.pop %v813
    %v815 = vsub.f32 1.0, %v811
    %v816 = vmul.f32 %v815, %v814
    %v817 = vmul.f32 %v811, %v706
    %v818 = vadd.f32 %v816, %v817
    %v819 = vsub.f32 %v818, %v706
    %821 = vset.pattern.permute.xlu0 0
    %822 = vperm.xlu0 %821, %v715
    %v823 = vpop.permute.xlu0 %822
    %v825 = vmul.f32 %v823, %v819
    %v826 = vadd.f32 %v706, %v825
    %v827 = vmul.f32 %v823, %v826
    %s828 = scalar_lea.vmem [#allocation8], 32
    %829 = vst [vmem:[%s828] sm:$0xff] %v827
    %s830 = scalar_lea.vmem [#allocation3], 120
    %v831 = vld [vmem:[%s830] sm:$0xff]
    %v832 = vld [vmem:[%s830 + $0x8] sm:$0xff]
    %v833 = vld [vmem:[%s830 + $0x10] sm:$0xff]
    %s834 = scalar_lea.vmem %s0, 40
    %v835 = vld [vmem:[%s834] sm:$0xff]
    %v836 = vpack.c.bf16 %v826, %v826
    %837 = vmatprep.subr.bf16.mxu0 %v212
    %838 = vmatpush1.bf16.msra.mxu0 %v211
    %839 = vmatprep.subr.bf16.mxu0 %v209
    %840 = vmatpush1.bf16.msra.mxu0 %v208
    %841 = vmatprep.subr.bf16.mxu0 %v206
    %842 = vmatpush1.bf16.msra.mxu0 %v205
    %843 = vmatprep.subr.bf16.mxu0 %v203
    %844 = vmatpush1.bf16.msra.mxu0 %v202
    %845 = vmatprep.subr.bf16.mxu0 %v200
    %846 = vmatpush1.bf16.msra.mxu0 %v199
    %847 = vmatprep.subr.bf16.mxu0 %v197
    %848 = vmatpush1.bf16.msra.mxu0 %v196
    %849 = vmatprep.subr.bf16.mxu0 %v194
    %850 = vmatpush1.bf16.msra.mxu0 %v193
    %851 = vmatprep.subr.bf16.mxu0 %v191
    %852 = vmatpush1.bf16.msra.mxu0 %v190
    %853 = vmatprep.subr.bf16.mxu0 0
    %854 = vmatpush2.bf16.msra.mxu0 0
    %855 = vmatprep.subr.bf16.mxu0 0
    %856 = vmatpush2.bf16.msra.mxu0 0
    %857 = vmatprep.subr.bf16.mxu0 0
    %858 = vmatpush2.bf16.msra.mxu0 0
    %859 = vmatprep.subr.bf16.mxu0 0
    %860 = vmatpush2.bf16.msra.mxu0 0
    %861 = vmatprep.subr.bf16.mxu0 0
    %862 = vmatpush2.bf16.msra.mxu0 0
    %863 = vmatprep.subr.bf16.mxu0 0
    %864 = vmatpush2.bf16.msra.mxu0 0
    %865 = vmatprep.subr.bf16.mxu0 0
    %866 = vmatpush2.bf16.msra.mxu0 0
    %867 = vmatprep.subr.bf16.mxu0 0
    %868 = vmatpush2.bf16.msra.mxu0 0
    %869 = vmatprep.mubr.bf16.mxu0 0
    %870 = vmatmul.mubr.bf16.gmra.mxu0 %v836
    %v871 = vpop.f32.mrf.mxu0
    %v872 = vadd.f32 %v98, %v871
    %v873 = vpop.f32.mrf.mxu0
    %v874 = vadd.f32 %v102, %v873
    %v875 = vpop.f32.mrf.mxu0
    %v876 = vpop.f32.mrf.mxu0
    %877 = vdwg.mxu0
    %878 = vmatprep.subr.bf16.mxu0 0
    %879 = vmatpush1.bf16.msra.mxu0 %v213
    %880 = vmatprep.subr.bf16.mxu0 0
    %881 = vmatpush1.bf16.msra.mxu0 %v210
    %882 = vmatprep.subr.bf16.mxu0 0
    %883 = vmatpush1.bf16.msra.mxu0 %v207
    %884 = vmatprep.subr.bf16.mxu0 0
    %885 = vmatpush1.bf16.msra.mxu0 %v204
    %886 = vmatprep.subr.bf16.mxu0 0
    %887 = vmatpush1.bf16.msra.mxu0 %v201
    %888 = vmatprep.subr.bf16.mxu0 0
    %889 = vmatpush1.bf16.msra.mxu0 %v198
    %890 = vmatprep.subr.bf16.mxu0 0
    %891 = vmatpush1.bf16.msra.mxu0 %v195
    %892 = vmatprep.subr.bf16.mxu0 0
    %893 = vmatpush1.bf16.msra.mxu0 %v192
    %894 = vmatprep.subr.bf16.mxu0 0
    %895 = vmatpush2.bf16.msra.mxu0 0
    %896 = vmatprep.subr.bf16.mxu0 0
    %897 = vmatpush2.bf16.msra.mxu0 0
    %898 = vmatprep.subr.bf16.mxu0 0
    %899 = vmatpush2.bf16.msra.mxu0 0
    %900 = vmatprep.subr.bf16.mxu0 0
    %901 = vmatpush2.bf16.msra.mxu0 0
    %902 = vmatprep.subr.bf16.mxu0 0
    %903 = vmatpush2.bf16.msra.mxu0 0
    %904 = vmatprep.subr.bf16.mxu0 0
    %905 = vmatpush2.bf16.msra.mxu0 0
    %906 = vmatprep.subr.bf16.mxu0 0
    %907 = vmatpush2.bf16.msra.mxu0 0
    %908 = vmatprep.subr.bf16.mxu0 0
    %909 = vmatpush2.bf16.msra.mxu0 0
    %910 = vmatprep.mubr.bf16.mxu0 0
    %911 = vmatmul.mubr.bf16.gmra.mxu0 %v836
    %v912 = vpop.f32.mrf.mxu0
    %v913 = vadd.f32 %v106, %v912
    %v914 = vpop.f32.mrf.mxu0
    %v915 = vpop.f32.mrf.mxu0
    %v916 = vpop.f32.mrf.mxu0
    %917 = vdwg.mxu0
    %v918 = vadd.f32 %v831, %v872
    %v919 = vxor.u32 %v918, 2147483648
    %v920 = vmul.f32 %v919, 1.442695
    %v921 = vpow.pop %v920
    %v922 = vadd.f32 %v921, 1.0
    %v923 = vrcp.pop %v922
    %v924 = vmul.f32 1.0, %v923
    %v925 = vadd.f32 %v832, %v874
    %v926 = vxor.u32 %v925, 2147483648
    %v927 = vmul.f32 %v926, 1.442695
    %v928 = vpow.pop %v927
    %v929 = vadd.f32 %v928, 1.0
    %v930 = vrcp.pop %v929
    %v931 = vmul.f32 1.0, %v930
    %v932 = vmul.f32 %v924, %v913
    %v933 = vadd.f32 %v833, %v932
    %v934 = vtanh.pop %v933
    %v935 = vsub.f32 1.0, %v931
    %v936 = vmul.f32 %v935, %v934
    %v937 = vmul.f32 %v931, %v826
    %v938 = vadd.f32 %v936, %v937
    %v939 = vsub.f32 %v938, %v826
    %941 = vset.pattern.permute.xlu0 0
    %942 = vperm.xlu0 %941, %v835
    %v943 = vpop.permute.xlu0 %942
    %v945 = vmul.f32 %v943, %v939
    %v946 = vadd.f32 %v826, %v945
    %v947 = vmul.f32 %v943, %v946
    %s948 = scalar_lea.vmem [#allocation8], 40
    %949 = vst [vmem:[%s948] sm:$0xff] %v947
    %s950 = scalar_lea.vmem [#allocation3], 144
    %v951 = vld [vmem:[%s950] sm:$0xff]
    %v952 = vld [vmem:[%s950 + $0x8] sm:$0xff]
    %v953 = vld [vmem:[%s950 + $0x10] sm:$0xff]
    %s954 = scalar_lea.vmem %s0, 48
    %v955 = vld [vmem:[%s954] sm:$0xff]
    %v956 = vpack.c.bf16 %v946, %v946
    %957 = vmatprep.subr.bf16.mxu0 %v212
    %958 = vmatpush1.bf16.msra.mxu0 %v211
    %959 = vmatprep.subr.bf16.mxu0 %v209
    %960 = vmatpush1.bf16.msra.mxu0 %v208
    %961 = vmatprep.subr.bf16.mxu0 %v206
    %962 = vmatpush1.bf16.msra.mxu0 %v205
    %963 = vmatprep.subr.bf16.mxu0 %v203
    %964 = vmatpush1.bf16.msra.mxu0 %v202
    %965 = vmatprep.subr.bf16.mxu0 %v200
    %966 = vmatpush1.bf16.msra.mxu0 %v199
    %967 = vmatprep.subr.bf16.mxu0 %v197
    %968 = vmatpush1.bf16.msra.mxu0 %v196
    %969 = vmatprep.subr.bf16.mxu0 %v194
    %970 = vmatpush1.bf16.msra.mxu0 %v193
    %971 = vmatprep.subr.bf16.mxu0 %v191
    %972 = vmatpush1.bf16.msra.mxu0 %v190
    %973 = vmatprep.subr.bf16.mxu0 0
    %974 = vmatpush2.bf16.msra.mxu0 0
    %975 = vmatprep.subr.bf16.mxu0 0
    %976 = vmatpush2.bf16.msra.mxu0 0
    %977 = vmatprep.subr.bf16.mxu0 0
    %978 = vmatpush2.bf16.msra.mxu0 0
    %979 = vmatprep.subr.bf16.mxu0 0
    %980 = vmatpush2.bf16.msra.mxu0 0
    %981 = vmatprep.subr.bf16.mxu0 0
    %982 = vmatpush2.bf16.msra.mxu0 0
    %983 = vmatprep.subr.bf16.mxu0 0
    %984 = vmatpush2.bf16.msra.mxu0 0
    %985 = vmatprep.subr.bf16.mxu0 0
    %986 = vmatpush2.bf16.msra.mxu0 0
    %987 = vmatprep.subr.bf16.mxu0 0
    %988 = vmatpush2.bf16.msra.mxu0 0
    %989 = vmatprep.mubr.bf16.mxu0 0
    %990 = vmatmul.mubr.bf16.gmra.mxu0 %v956
    %v991 = vpop.f32.mrf.mxu0
    %v992 = vadd.f32 %v98, %v991
    %v993 = vpop.f32.mrf.mxu0
    %v994 = vadd.f32 %v102, %v993
    %v995 = vpop.f32.mrf.mxu0
    %v996 = vpop.f32.mrf.mxu0
    %997 = vdwg.mxu0
    %998 = vmatprep.subr.bf16.mxu0 0
    %999 = vmatpush1.bf16.msra.mxu0 %v213
    %1000 = vmatprep.subr.bf16.mxu0 0
    %1001 = vmatpush1.bf16.msra.mxu0 %v210
    %1002 = vmatprep.subr.bf16.mxu0 0
    %1003 = vmatpush1.bf16.msra.mxu0 %v207
    %1004 = vmatprep.subr.bf16.mxu0 0
    %1005 = vmatpush1.bf16.msra.mxu0 %v204
    %1006 = vmatprep.subr.bf16.mxu0 0
    %1007 = vmatpush1.bf16.msra.mxu0 %v201
    %1008 = vmatprep.subr.bf16.mxu0 0
    %1009 = vmatpush1.bf16.msra.mxu0 %v198
    %1010 = vmatprep.subr.bf16.mxu0 0
    %1011 = vmatpush1.bf16.msra.mxu0 %v195
    %1012 = vmatprep.subr.bf16.mxu0 0
    %1013 = vmatpush1.bf16.msra.mxu0 %v192
    %1014 = vmatprep.subr.bf16.mxu0 0
    %1015 = vmatpush2.bf16.msra.mxu0 0
    %1016 = vmatprep.subr.bf16.mxu0 0
    %1017 = vmatpush2.bf16.msra.mxu0 0
    %1018 = vmatprep.subr.bf16.mxu0 0
    %1019 = vmatpush2.bf16.msra.mxu0 0
    %1020 = vmatprep.subr.bf16.mxu0 0
    %1021 = vmatpush2.bf16.msra.mxu0 0
    %1022 = vmatprep.subr.bf16.mxu0 0
    %1023 = vmatpush2.bf16.msra.mxu0 0
    %1024 = vmatprep.subr.bf16.mxu0 0
    %1025 = vmatpush2.bf16.msra.mxu0 0
    %1026 = vmatprep.subr.bf16.mxu0 0
    %1027 = vmatpush2.bf16.msra.mxu0 0
    %1028 = vmatprep.subr.bf16.mxu0 0
    %1029 = vmatpush2.bf16.msra.mxu0 0
    %1030 = vmatprep.mubr.bf16.mxu0 0
    %1031 = vmatmul.mubr.bf16.gmra.mxu0 %v956
    %v1032 = vpop.f32.mrf.mxu0
    %v1033 = vadd.f32 %v106, %v1032
    %v1034 = vpop.f32.mrf.mxu0
    %v1035 = vpop.f32.mrf.mxu0
    %v1036 = vpop.f32.mrf.mxu0
    %1037 = vdwg.mxu0
    %v1038 = vadd.f32 %v951, %v992
    %v1039 = vxor.u32 %v1038, 2147483648
    %v1040 = vmul.f32 %v1039, 1.442695
    %v1041 = vpow.pop %v1040
    %v1042 = vadd.f32 %v1041, 1.0
    %v1043 = vrcp.pop %v1042
    %v1044 = vmul.f32 1.0, %v1043
    %v1045 = vadd.f32 %v952, %v994
    %v1046 = vxor.u32 %v1045, 2147483648
    %v1047 = vmul.f32 %v1046, 1.442695
    %v1048 = vpow.pop %v1047
    %v1049 = vadd.f32 %v1048, 1.0
    %v1050 = vrcp.pop %v1049
    %v1051 = vmul.f32 1.0, %v1050
    %v1052 = vmul.f32 %v1044, %v1033
    %v1053 = vadd.f32 %v953, %v1052
    %v1054 = vtanh.pop %v1053
    %v1055 = vsub.f32 1.0, %v1051
    %v1056 = vmul.f32 %v1055, %v1054
    %v1057 = vmul.f32 %v1051, %v946
    %v1058 = vadd.f32 %v1056, %v1057
    %v1059 = vsub.f32 %v1058, %v946
    %1061 = vset.pattern.permute.xlu0 0
    %1062 = vperm.xlu0 %1061, %v955
    %v1063 = vpop.permute.xlu0 %1062
    %v1065 = vmul.f32 %v1063, %v1059
    %v1066 = vadd.f32 %v946, %v1065
    %v1067 = vmul.f32 %v1063, %v1066
    %s1068 = scalar_lea.vmem [#allocation8], 48
    %1069 = vst [vmem:[%s1068] sm:$0xff] %v1067
    %s1070 = scalar_lea.vmem [#allocation3], 168
    %v1071 = vld [vmem:[%s1070] sm:$0xff]
    %v1072 = vld [vmem:[%s1070 + $0x8] sm:$0xff]
    %v1073 = vld [vmem:[%s1070 + $0x10] sm:$0xff]
    %s1074 = scalar_lea.vmem %s0, 56
    %v1075 = vld [vmem:[%s1074] sm:$0xff]
    %v1076 = vpack.c.bf16 %v1066, %v1066
    %1077 = vmatprep.subr.bf16.mxu0 %v212
    %1078 = vmatpush1.bf16.msra.mxu0 %v211
    %1079 = vmatprep.subr.bf16.mxu0 %v209
    %1080 = vmatpush1.bf16.msra.mxu0 %v208
    %1081 = vmatprep.subr.bf16.mxu0 %v206
    %1082 = vmatpush1.bf16.msra.mxu0 %v205
    %1083 = vmatprep.subr.bf16.mxu0 %v203
    %1084 = vmatpush1.bf16.msra.mxu0 %v202
    %1085 = vmatprep.subr.bf16.mxu0 %v200
    %1086 = vmatpush1.bf16.msra.mxu0 %v199
    %1087 = vmatprep.subr.bf16.mxu0 %v197
    %1088 = vmatpush1.bf16.msra.mxu0 %v196
    %1089 = vmatprep.subr.bf16.mxu0 %v194
    %1090 = vmatpush1.bf16.msra.mxu0 %v193
    %1091 = vmatprep.subr.bf16.mxu0 %v191
    %1092 = vmatpush1.bf16.msra.mxu0 %v190
    %1093 = vmatprep.subr.bf16.mxu0 0
    %1094 = vmatpush2.bf16.msra.mxu0 0
    %1095 = vmatprep.subr.bf16.mxu0 0
    %1096 = vmatpush2.bf16.msra.mxu0 0
    %1097 = vmatprep.subr.bf16.mxu0 0
    %1098 = vmatpush2.bf16.msra.mxu0 0
    %1099 = vmatprep.subr.bf16.mxu0 0
    %1100 = vmatpush2.bf16.msra.mxu0 0
    %1101 = vmatprep.subr.bf16.mxu0 0
    %1102 = vmatpush2.bf16.msra.mxu0 0
    %1103 = vmatprep.subr.bf16.mxu0 0
    %1104 = vmatpush2.bf16.msra.mxu0 0
    %1105 = vmatprep.subr.bf16.mxu0 0
    %1106 = vmatpush2.bf16.msra.mxu0 0
    %1107 = vmatprep.subr.bf16.mxu0 0
    %1108 = vmatpush2.bf16.msra.mxu0 0
    %1109 = vmatprep.mubr.bf16.mxu0 0
    %1110 = vmatmul.mubr.bf16.gmra.mxu0 %v1076
    %v1111 = vpop.f32.mrf.mxu0
    %v1112 = vadd.f32 %v98, %v1111
    %v1113 = vpop.f32.mrf.mxu0
    %v1114 = vadd.f32 %v102, %v1113
    %v1115 = vpop.f32.mrf.mxu0
    %v1116 = vpop.f32.mrf.mxu0
    %1117 = vdwg.mxu0
    %1118 = vmatprep.subr.bf16.mxu0 0
    %1119 = vmatpush1.bf16.msra.mxu0 %v213
    %1120 = vmatprep.subr.bf16.mxu0 0
    %1121 = vmatpush1.bf16.msra.mxu0 %v210
    %1122 = vmatprep.subr.bf16.mxu0 0
    %1123 = vmatpush1.bf16.msra.mxu0 %v207
    %1124 = vmatprep.subr.bf16.mxu0 0
    %1125 = vmatpush1.bf16.msra.mxu0 %v204
    %1126 = vmatprep.subr.bf16.mxu0 0
    %1127 = vmatpush1.bf16.msra.mxu0 %v201
    %1128 = vmatprep.subr.bf16.mxu0 0
    %1129 = vmatpush1.bf16.msra.mxu0 %v198
    %1130 = vmatprep.subr.bf16.mxu0 0
    %1131 = vmatpush1.bf16.msra.mxu0 %v195
    %1132 = vmatprep.subr.bf16.mxu0 0
    %1133 = vmatpush1.bf16.msra.mxu0 %v192
    %1134 = vmatprep.subr.bf16.mxu0 0
    %1135 = vmatpush2.bf16.msra.mxu0 0
    %1136 = vmatprep.subr.bf16.mxu0 0
    %1137 = vmatpush2.bf16.msra.mxu0 0
    %1138 = vmatprep.subr.bf16.mxu0 0
    %1139 = vmatpush2.bf16.msra.mxu0 0
    %1140 = vmatprep.subr.bf16.mxu0 0
    %1141 = vmatpush2.bf16.msra.mxu0 0
    %1142 = vmatprep.subr.bf16.mxu0 0
    %1143 = vmatpush2.bf16.msra.mxu0 0
    %1144 = vmatprep.subr.bf16.mxu0 0
    %1145 = vmatpush2.bf16.msra.mxu0 0
    %1146 = vmatprep.subr.bf16.mxu0 0
    %1147 = vmatpush2.bf16.msra.mxu0 0
    %1148 = vmatprep.subr.bf16.mxu0 0
    %1149 = vmatpush2.bf16.msra.mxu0 0
    %1150 = vmatprep.mubr.bf16.mxu0 0
    %1151 = vmatmul.mubr.bf16.gmra.mxu0 %v1076
    %v1152 = vpop.f32.mrf.mxu0
    %v1153 = vadd.f32 %v106, %v1152
    %v1154 = vpop.f32.mrf.mxu0
    %v1155 = vpop.f32.mrf.mxu0
    %v1156 = vpop.f32.mrf.mxu0
    %1157 = vdwg.mxu0
    %v1158 = vadd.f32 %v1071, %v1112
    %v1159 = vxor.u32 %v1158, 2147483648
    %v1160 = vmul.f32 %v1159, 1.442695
    %v1161 = vpow.pop %v1160
    %v1162 = vadd.f32 %v1161, 1.0
    %v1163 = vrcp.pop %v1162
    %v1164 = vmul.f32 1.0, %v1163
    %v1165 = vadd.f32 %v1072, %v1114
    %v1166 = vxor.u32 %v1165, 2147483648
    %v1167 = vmul.f32 %v1166, 1.442695
    %v1168 = vpow.pop %v1167
    %v1169 = vadd.f32 %v1168, 1.0
    %v1170 = vrcp.pop %v1169
    %v1171 = vmul.f32 1.0, %v1170
    %v1172 = vmul.f32 %v1164, %v1153
    %v1173 = vadd.f32 %v1073, %v1172
    %v1174 = vtanh.pop %v1173
    %v1175 = vsub.f32 1.0, %v1171
    %v1176 = vmul.f32 %v1175, %v1174
    %v1177 = vmul.f32 %v1171, %v1066
    %v1178 = vadd.f32 %v1176, %v1177
    %v1179 = vsub.f32 %v1178, %v1066
    %1181 = vset.pattern.permute.xlu0 0
    %1182 = vperm.xlu0 %1181, %v1075
    %v1183 = vpop.permute.xlu0 %1182
    %v1185 = vmul.f32 %v1183, %v1179
    %v1186 = vadd.f32 %v1066, %v1185
    %v1187 = vmul.f32 %v1183, %v1186
    %s1188 = scalar_lea.vmem [#allocation8], 56
    %1189 = vst [vmem:[%s1188] sm:$0xff] %v1187
    %1190 = vst [vmem:[#allocation2] sm:$0xff] %v1186
    // Predicated region
    $region30: #{tpu_custom_call.1} parent=1 // pred_check
      %p1191 = pneg %p50
    $region31: #{tpu_custom_call.1} parent=1 // pred_check_branch
      %1193 = sbr.rel (%p1191) target = $region33
    $region32: #{tpu_custom_call.1} parent=1 // pred_region
      %1194 = vst [vmem:[#allocation9] sm:$0xff] %v1186
    $region33: #{tpu_custom_call.1} parent=1 // pred_fallthru
      _
    // Predicated region
    $region34: #{tpu_custom_call.1} parent=1 // pred_check
      _
    $region35: #{tpu_custom_call.1} parent=1 // pred_check_branch
      %1196 = sbr.rel (0) target = $region37
    $region36: #{tpu_custom_call.1} parent=1 // pred_region
      %s1198 = ssub.s32 1024, 1024
      %1199 = vsyncadd [#allocation5], %s1198
      %s1200 = sshll.u32 [#allocation8], 4
      %s1201 = int_to_ptr.vmem [resolvable:$true] %s1200
      %1206 = dma.vmem_to_hbm [thread:$0]  %s1201, 1024, %s4, [#allocation5], 128, 128, 8
    $region37: #{tpu_custom_call.1} parent=1 // pred_fallthru
      _
    // Predicated region
    $region38: #{tpu_custom_call.1} parent=1 // pred_check
      _
    $region39: #{tpu_custom_call.1} parent=1 // pred_check_branch
      %1208 = sbr.rel (0) target = $region41
    $region40: #{tpu_custom_call.1} parent=1 // pred_region
      %s1210 = ssub.s32 128, 128
      %1211 = vsyncadd [#allocation10], %s1210
      %s1213 = sshll.u32 [#allocation9], 4
      %s1214 = int_to_ptr.vmem [resolvable:$true] %s1213
      %1216 = dma.vmem_to_hbm [thread:$0]  %s1214, 128, %s5, [#allocation10]
    $region41: #{tpu_custom_call.1} parent=1 // pred_fallthru
      _
    // Predicated region
    $region42: #{tpu_custom_call.1} parent=1 // pred_check
      _
    $region43: #{tpu_custom_call.1} parent=1 // pred_check_branch
      %1218 = sbr.rel (0) target = $region45
    $region44: #{tpu_custom_call.1} parent=1 // pred_region
      %1219 = dma.done [#allocation5], 1024
    $region45: #{tpu_custom_call.1} parent=1 // pred_fallthru
      _
    // Predicated region
    $region46: #{tpu_custom_call.1} parent=1 // pred_check
      _
    $region47: #{tpu_custom_call.1} parent=1 // pred_check_branch
      %1221 = sbr.rel (0) target = $region49
    $region48: #{tpu_custom_call.1} parent=1 // pred_region
      %1222 = dma.done [#allocation10], 128
    $region49: #{tpu_custom_call.1} parent=1 // pred_fallthru
      _
    %1223 = vsyncpa [#allocation4], 1
    %1224 = vsyncpa [#allocation7], 1
    %1225 = vsyncpa [#allocation5], 1
    %1226 = vsyncpa [#allocation10], 1

</llo_original>
